<compile_context>
chip_gen: v7x
topology: tpu7x:2x2x1
jax: 0.10.0
libtpu: 0.0.40
codegen_flags: <defaults>
</compile_context>

<pallas_src>
import jax
import jax.numpy as jnp
from jax import lax
from jax.experimental import pallas as pl
from jax.experimental.pallas import tpu as pltpu


# --------------------------------------------------------------------------- #
# Kernel
# --------------------------------------------------------------------------- #
def _e2e_elementwise_kernel(x_ref, w_ref, o_ref):
    """x_ref: (TN, C, d, d); w_ref: (C, TP, d, d); o_ref: (TN, TP, d, d)."""
    TN, C = x_ref.shape[0], x_ref.shape[1]
    TP, d = w_ref.shape[1], w_ref.shape[2]
    unroll = min(C, 8)                     # capped unroll: carried state is tiny

    for n in range(TN):                    # static, small; each sample drains to o_ref
        def chan_body(c, carry):
            row_acc, col_acc = carry
            xc = x_ref[n, c].astype(jnp.float32)          # (d, d)     sample plane
            wc = w_ref[c].astype(jnp.float32)             # (TP, d, d) filter planes
            prod = xc[None, :, :] * wc                    # (TP, d, d) transient only
            # Reduce immediately -> only (TP,1,d)+(TP,d,1) are carried (XLU slot).
            row_acc = row_acc + jnp.sum(prod, axis=1, keepdims=True)   # sum over i
            col_acc = col_acc + jnp.sum(prod, axis=2, keepdims=True)   # sum over j
            return row_acc, col_acc

        row0 = jnp.zeros((TP, 1, d), jnp.float32)
        col0 = jnp.zeros((TP, d, 1), jnp.float32)
        row_acc, col_acc = lax.fori_loop(0, C, chan_body, (row0, col0),
                                         unroll=unroll)
        # out[p,i,j] = row[p,j] + col[p,i]
        o_ref[n] = (row_acc + col_acc).astype(o_ref.dtype)


# --------------------------------------------------------------------------- #
# Tiling / VMEM budgeting
# --------------------------------------------------------------------------- #
def _vmem_budget_bytes():
    """~70% of physical VMEM, clamped to [32 MiB, 100 MiB] (v7x=64MiB, v5e/v6e=128MiB)."""
    cap = 64 * 1024 * 1024                 # conservative default (v7x-class)
    try:
        info = pltpu.get_tpu_info()
        c = getattr(info, "vmem_capacity_bytes", None)
        if c:
            cap = int(c)
    except Exception:
        pass
    return max(32 * 1024 * 1024, min(int(cap * 0.70), 100 * 1024 * 1024))


def _divisors_desc(n):
    return [k for k in range(n, 0, -1) if n % k == 0]


def _pick_tiles(N, P, C, d, budget_bytes, *, target_tn=8, itemsize=4):
    """Pick (tp, tn) modelling the real per-step VMEM working set."""
    plane = d * d * itemsize

    def need_bytes(tp, tn):
        x_blk = 2 * tn * C * plane          # double-buffered x block
        w_blk = 2 * C * tp * plane          # weight slab (2x: conservative fallback)
        o_blk = 2 * tn * tp * plane         # double-buffered out block
        scratch = tp * plane + 2 * tp * d * itemsize + 2 * plane   # prod + row/col + xc
        return x_blk + w_blk + o_blk + scratch

    # 1) largest divisor tp of P that fits (prefer the whole weight resident).
    tp = 1
    for cand in _divisors_desc(P):
        if need_bytes(cand, 1) <= budget_bytes:
            tp = cand
            break

    # 2) grow tn within budget; keep >=2 steps on a parallel axis for v7x
    #    megacore when the plane axis collapses to a single step.
    tn_cap = min(target_tn, N)
    if P // tp == 1 and N >= 2:
        tn_cap = min(tn_cap, max(1, N // 2))
    tn = 1
    for cand in _divisors_desc(N):
        if cand <= tn_cap and need_bytes(tp, cand) <= budget_bytes:
            tn = cand
            break
    return tp, tn


# --------------------------------------------------------------------------- #
# Wrapper
# --------------------------------------------------------------------------- #
def prepare_weight(weight):
    """Channel-major weight (C, P, d, d).  Call ONCE per parameter (hoisted
    out of the per-invocation hot path)."""
    return jnp.transpose(weight, (1, 0, 2, 3))


def edge_to_edge_elementwise(x, weight_cm, bias=None, *, tp=None, tn=None):
    """x: (N, C, d, d), weight_cm: (C, P, d, d) channel-major -> (N, P, d, d)."""
    N, C, d, d2 = x.shape
    assert d == d2, "spatial dims must be square"
    assert weight_cm.shape[0] == C and weight_cm.shape[2:] == (d, d)
    P = weight_cm.shape[1]

    budget = _vmem_budget_bytes()
    auto_tp, auto_tn = _pick_tiles(N, P, C, d, budget)
    tp = auto_tp if tp is None else tp
    tn = auto_tn if tn is None else tn
    assert P % tp == 0 and N % tn == 0

    # Adaptive grid ordering: the operand on the OUTER axis is fetched exactly
    # once; the other is re-fetched (#outer-steps) times.  Minimize HBM traffic.
    itemsize = 4
    x_bytes = N * C * d * d * itemsize
    w_bytes = P * C * d * d * itemsize
    weight_outer = (w_bytes + x_bytes * (P // tp)) <= (x_bytes + w_bytes * (N // tn))

    if weight_outer:
        grid = (P // tp, N // tn)           # weight slab resident, x streams once/pb
        x_map = lambda pb, nb: (nb, 0, 0, 0)
        w_map = lambda pb, nb: (0, pb, 0, 0)
        o_map = lambda pb, nb: (nb, pb, 0, 0)
    else:
        grid = (N // tn, P // tp)           # x block resident, weight streams once/nb
        x_map = lambda nb, pb: (nb, 0, 0, 0)
        w_map = lambda nb, pb: (0, pb, 0, 0)
        o_map = lambda nb, pb: (nb, pb, 0, 0)

    def build(w_buffer_count):
        w_kwargs = {}
        if w_buffer_count is not None:
            # Weight block index is constant along the inner axis -> single
            # buffering only saves VMEM, no overlap lost except on pb changes.
            w_kwargs["pipeline_mode"] = pl.Buffered(w_buffer_count)
        return pl.pallas_call(
            _e2e_elementwise_kernel,
            out_shape=jax.ShapeDtypeStruct((N, P, d, d), x.dtype),
            grid_spec=pltpu.PrefetchScalarGridSpec(
                num_scalar_prefetch=0,
                grid=grid,
                in_specs=[
                    pl.BlockSpec((tn, C, d, d), x_map),
                    pl.BlockSpec((C, tp, d, d), w_map, **w_kwargs),
                ],
                out_specs=pl.BlockSpec((tn, tp, d, d), o_map),
            ),
            compiler_params=pltpu.CompilerParams(
                dimension_semantics=("parallel", "parallel"),
                vmem_limit_bytes=int(budget)),
        )

    out = None
    if weight_outer:
        try:
            out = jax.block_until_ready(build(1)(x, weight_cm))
        except Exception:
            out = None                      # this JAX rejects buffer_count=1
    if out is None:
        out = build(None)(x, weight_cm)

    if bias is not None:
        # PyTorch adds bias in both conv passes -> it appears twice in the sum.
        out = out + 2.0 * bias[None, :, None, None]
    return out


# --------------------------------------------------------------------------- #
# Demo / correctness check
# --------------------------------------------------------------------------- #
if __name__ == "__main__":
    # Small shapes consistent with the module (original uses d=90; demo d=16).
    N, C, P, d = 2, 4, 4, 16

    key = jax.random.PRNGKey(0)
    kx, kw = jax.random.split(key)
    x = jax.random.normal(kx, (N, C, d, d), dtype=jnp.float32)

    # Deterministic xavier_uniform_ equivalent for weight (P, C, d, d).
    fan_in, fan_out = C * d * d, P * d * d
    bound = (6.0 / (fan_in + fan_out)) ** 0.5
    weight = jax.random.uniform(
        kw, (P, C, d, d), dtype=jnp.float32, minval=-bound, maxval=bound)
    # bias=False in the reference config -> no bias term.

    w_cm = prepare_weight(weight)           # hoisted: transpose the parameter once

    out = edge_to_edge_elementwise(x, w_cm)
    out = jax.block_until_ready(out)

    # Pure-JAX reference for correctness check.
    prod = jnp.einsum("ncij,pcij->npij", x, weight)
    row = prod.sum(axis=2)[:, :, None, :]   # (N, P, 1, d)
    col = prod.sum(axis=3)[:, :, :, None]   # (N, P, d, 1)
    ref = row + col
    assert out.shape == (N, P, d, d)
    assert jnp.allclose(out, ref, atol=1e-4, rtol=1e-4), "mismatch vs reference"

    print("KERNEL_OK")
</pallas_src>

<mosaic_0001>
module attributes {stable_mosaic.version = 11 : i64} {
  func.func @_e2e_elementwise_kernel(%arg0: i32, %arg1: i32, %arg2: memref<1x4x16x16xf32, #tpu.memory_space<vmem>>, %arg3: memref<4x4x16x16xf32, #tpu.memory_space<vmem>>, %arg4: memref<1x4x16x16xf32, #tpu.memory_space<vmem>>) attributes {dimension_semantics = [#tpu.dimension_semantics<parallel>, #tpu.dimension_semantics<parallel>], iteration_bounds = array<i64: 1, 2>, scalar_prefetch = 0 : i64, scratch_operands = 0 : i64, tpu.core_type = #tpu.core_type<tc>, window_params = [{transform_indices = @transform_0, window_bounds = array<i64: 1, 4, 16, 16>}, {pipeline_mode = #tpu.pipeline_mode<synchronous>, transform_indices = @transform_1, window_bounds = array<i64: 4, 4, 16, 16>}, {transform_indices = @transform_2, window_bounds = array<i64: 1, 4, 16, 16>}]} {
    %cst = arith.constant 0.000000e+00 : f32
    %0 = vector.broadcast %cst : f32 to vector<4x1x16xf32>
    %cst_0 = arith.constant 0.000000e+00 : f32
    %1 = vector.broadcast %cst_0 : f32 to vector<4x16x1xf32>
    %c0_i32 = arith.constant 0 : i32
    %c0 = arith.constant 0 : index
    %2 = arith.index_cast %c0_i32 : i32 to index
    %c0_1 = arith.constant 0 : index
    %c0_2 = arith.constant 0 : index
    %3 = vector.load %arg2[%c0, %2, %c0_1, %c0_2] : memref<1x4x16x16xf32, #tpu.memory_space<vmem>>, vector<1x1x16x16xf32>
    %4 = vector.shape_cast %3 : vector<1x1x16x16xf32> to vector<16x16xf32>
    %5 = arith.index_cast %c0_i32 : i32 to index
    %c0_3 = arith.constant 0 : index
    %c0_4 = arith.constant 0 : index
    %c0_5 = arith.constant 0 : index
    %6 = vector.load %arg3[%5, %c0_3, %c0_4, %c0_5] : memref<4x4x16x16xf32, #tpu.memory_space<vmem>>, vector<1x4x16x16xf32>
    %7 = vector.shape_cast %6 : vector<1x4x16x16xf32> to vector<4x16x16xf32>
    %8 = vector.shape_cast %4 : vector<16x16xf32> to vector<1x16x16xf32>
    %9 = vector.broadcast %8 : vector<1x16x16xf32> to vector<4x16x16xf32>
    %10 = arith.mulf %9, %7 : vector<4x16x16xf32>
    %cst_6 = arith.constant dense<0.000000e+00> : vector<4x16xf32>
    %11 = vector.multi_reduction <add>, %10, %cst_6 [1] : vector<4x16x16xf32> to vector<4x16xf32>
    %12 = vector.shape_cast %11 : vector<4x16xf32> to vector<4x1x16xf32>
    %13 = arith.addf %0, %12 : vector<4x1x16xf32>
    %cst_7 = arith.constant dense<0.000000e+00> : vector<4x16xf32>
    %14 = vector.multi_reduction <add>, %10, %cst_7 [2] : vector<4x16x16xf32> to vector<4x16xf32>
    %15 = vector.shape_cast %14 : vector<4x16xf32> to vector<4x16x1xf32>
    %16 = arith.addf %1, %15 : vector<4x16x1xf32>
    %c1_i32 = arith.constant 1 : i32
    %c0_8 = arith.constant 0 : index
    %17 = arith.index_cast %c1_i32 : i32 to index
    %c0_9 = arith.constant 0 : index
    %c0_10 = arith.constant 0 : index
    %18 = vector.load %arg2[%c0_8, %17, %c0_9, %c0_10] : memref<1x4x16x16xf32, #tpu.memory_space<vmem>>, vector<1x1x16x16xf32>
    %19 = vector.shape_cast %18 : vector<1x1x16x16xf32> to vector<16x16xf32>
    %20 = arith.index_cast %c1_i32 : i32 to index
    %c0_11 = arith.constant 0 : index
    %c0_12 = arith.constant 0 : index
    %c0_13 = arith.constant 0 : index
    %21 = vector.load %arg3[%20, %c0_11, %c0_12, %c0_13] : memref<4x4x16x16xf32, #tpu.memory_space<vmem>>, vector<1x4x16x16xf32>
    %22 = vector.shape_cast %21 : vector<1x4x16x16xf32> to vector<4x16x16xf32>
    %23 = vector.shape_cast %19 : vector<16x16xf32> to vector<1x16x16xf32>
    %24 = vector.broadcast %23 : vector<1x16x16xf32> to vector<4x16x16xf32>
    %25 = arith.mulf %24, %22 : vector<4x16x16xf32>
    %cst_14 = arith.constant dense<0.000000e+00> : vector<4x16xf32>
    %26 = vector.multi_reduction <add>, %25, %cst_14 [1] : vector<4x16x16xf32> to vector<4x16xf32>
    %27 = vector.shape_cast %26 : vector<4x16xf32> to vector<4x1x16xf32>
    %28 = arith.addf %13, %27 : vector<4x1x16xf32>
    %cst_15 = arith.constant dense<0.000000e+00> : vector<4x16xf32>
    %29 = vector.multi_reduction <add>, %25, %cst_15 [2] : vector<4x16x16xf32> to vector<4x16xf32>
    %30 = vector.shape_cast %29 : vector<4x16xf32> to vector<4x16x1xf32>
    %31 = arith.addf %16, %30 : vector<4x16x1xf32>
    %c2_i32 = arith.constant 2 : i32
    %c0_16 = arith.constant 0 : index
    %32 = arith.index_cast %c2_i32 : i32 to index
    %c0_17 = arith.constant 0 : index
    %c0_18 = arith.constant 0 : index
    %33 = vector.load %arg2[%c0_16, %32, %c0_17, %c0_18] : memref<1x4x16x16xf32, #tpu.memory_space<vmem>>, vector<1x1x16x16xf32>
    %34 = vector.shape_cast %33 : vector<1x1x16x16xf32> to vector<16x16xf32>
    %35 = arith.index_cast %c2_i32 : i32 to index
    %c0_19 = arith.constant 0 : index
    %c0_20 = arith.constant 0 : index
    %c0_21 = arith.constant 0 : index
    %36 = vector.load %arg3[%35, %c0_19, %c0_20, %c0_21] : memref<4x4x16x16xf32, #tpu.memory_space<vmem>>, vector<1x4x16x16xf32>
    %37 = vector.shape_cast %36 : vector<1x4x16x16xf32> to vector<4x16x16xf32>
    %38 = vector.shape_cast %34 : vector<16x16xf32> to vector<1x16x16xf32>
    %39 = vector.broadcast %38 : vector<1x16x16xf32> to vector<4x16x16xf32>
    %40 = arith.mulf %39, %37 : vector<4x16x16xf32>
    %cst_22 = arith.constant dense<0.000000e+00> : vector<4x16xf32>
    %41 = vector.multi_reduction <add>, %40, %cst_22 [1] : vector<4x16x16xf32> to vector<4x16xf32>
    %42 = vector.shape_cast %41 : vector<4x16xf32> to vector<4x1x16xf32>
    %43 = arith.addf %28, %42 : vector<4x1x16xf32>
    %cst_23 = arith.constant dense<0.000000e+00> : vector<4x16xf32>
    %44 = vector.multi_reduction <add>, %40, %cst_23 [2] : vector<4x16x16xf32> to vector<4x16xf32>
    %45 = vector.shape_cast %44 : vector<4x16xf32> to vector<4x16x1xf32>
    %46 = arith.addf %31, %45 : vector<4x16x1xf32>
    %c3_i32 = arith.constant 3 : i32
    %c0_24 = arith.constant 0 : index
    %47 = arith.index_cast %c3_i32 : i32 to index
    %c0_25 = arith.constant 0 : index
    %c0_26 = arith.constant 0 : index
    %48 = vector.load %arg2[%c0_24, %47, %c0_25, %c0_26] : memref<1x4x16x16xf32, #tpu.memory_space<vmem>>, vector<1x1x16x16xf32>
    %49 = vector.shape_cast %48 : vector<1x1x16x16xf32> to vector<16x16xf32>
    %50 = arith.index_cast %c3_i32 : i32 to index
    %c0_27 = arith.constant 0 : index
    %c0_28 = arith.constant 0 : index
    %c0_29 = arith.constant 0 : index
    %51 = vector.load %arg3[%50, %c0_27, %c0_28, %c0_29] : memref<4x4x16x16xf32, #tpu.memory_space<vmem>>, vector<1x4x16x16xf32>
    %52 = vector.shape_cast %51 : vector<1x4x16x16xf32> to vector<4x16x16xf32>
    %53 = vector.shape_cast %49 : vector<16x16xf32> to vector<1x16x16xf32>
    %54 = vector.broadcast %53 : vector<1x16x16xf32> to vector<4x16x16xf32>
    %55 = arith.mulf %54, %52 : vector<4x16x16xf32>
    %cst_30 = arith.constant dense<0.000000e+00> : vector<4x16xf32>
    %56 = vector.multi_reduction <add>, %55, %cst_30 [1] : vector<4x16x16xf32> to vector<4x16xf32>
    %57 = vector.shape_cast %56 : vector<4x16xf32> to vector<4x1x16xf32>
    %58 = arith.addf %43, %57 : vector<4x1x16xf32>
    %cst_31 = arith.constant dense<0.000000e+00> : vector<4x16xf32>
    %59 = vector.multi_reduction <add>, %55, %cst_31 [2] : vector<4x16x16xf32> to vector<4x16xf32>
    %60 = vector.shape_cast %59 : vector<4x16xf32> to vector<4x16x1xf32>
    %61 = arith.addf %46, %60 : vector<4x16x1xf32>
    %c4_i32 = arith.constant 4 : i32
    %62 = vector.broadcast %58 : vector<4x1x16xf32> to vector<4x16x16xf32>
    %63 = vector.broadcast %61 : vector<4x16x1xf32> to vector<4x16x16xf32>
    %64 = arith.addf %62, %63 : vector<4x16x16xf32>
    %c0_32 = arith.constant 0 : index
    %c0_33 = arith.constant 0 : index
    %c0_34 = arith.constant 0 : index
    %c0_35 = arith.constant 0 : index
    %65 = vector.load %arg4[%c0_32, %c0_33, %c0_34, %c0_35] : memref<1x4x16x16xf32, #tpu.memory_space<vmem>>, vector<1x4x16x16xf32>
    %66 = vector.shape_cast %65 : vector<1x4x16x16xf32> to vector<4x16x16xf32>
    %67 = vector.shape_cast %64 : vector<4x16x16xf32> to vector<1x4x16x16xf32>
    tpu.vector_store %arg4[%c0_32, %c0_33, %c0_34, %c0_35], %67 {strides = array<i32>} : memref<1x4x16x16xf32, #tpu.memory_space<vmem>>, vector<1x4x16x16xf32>,
    return
  }
  func.func @transform_0(%arg0: i32, %arg1: i32) -> (i32, i32, i32, i32) {
    %c0_i32 = arith.constant 0 : i32
    %c0_i32_0 = arith.constant 0 : i32
    %c0_i32_1 = arith.constant 0 : i32
    %c0_i32_2 = arith.constant 0 : i32
    return %arg1, %c0_i32, %c0_i32_0, %c0_i32_1 : i32, i32, i32, i32
  }
  func.func @transform_1(%arg0: i32, %arg1: i32) -> (i32, i32, i32, i32) {
    %c0_i32 = arith.constant 0 : i32
    %c0_i32_0 = arith.constant 0 : i32
    %c0_i32_1 = arith.constant 0 : i32
    %c0_i32_2 = arith.constant 0 : i32
    return %c0_i32, %arg0, %c0_i32_0, %c0_i32_1 : i32, i32, i32, i32
  }
  func.func @transform_2(%arg0: i32, %arg1: i32) -> (i32, i32, i32, i32) {
    %c0_i32 = arith.constant 0 : i32
    %c0_i32_0 = arith.constant 0 : i32
    %c0_i32_1 = arith.constant 0 : i32
    return %arg1, %arg0, %c0_i32, %c0_i32_0 : i32, i32, i32, i32
  }
}

module attributes {stable_mosaic.version = 11 : i64} {
  func.func @_e2e_elementwise_kernel(%arg0: i32, %arg1: i32, %arg2: memref<1x4x16x16xf32, #tpu.memory_space<vmem>>, %arg3: memref<4x4x16x16xf32, #tpu.memory_space<vmem>>, %arg4: memref<1x4x16x16xf32, #tpu.memory_space<vmem>>) attributes {dimension_semantics = [#tpu.dimension_semantics<parallel>, #tpu.dimension_semantics<parallel>], iteration_bounds = array<i64: 1, 2>, scalar_prefetch = 0 : i64, scratch_operands = 0 : i64, tpu.core_type = #tpu.core_type<tc>, window_params = [{transform_indices = @transform_0, window_bounds = array<i64: 1, 4, 16, 16>}, {transform_indices = @transform_1, window_bounds = array<i64: 4, 4, 16, 16>}, {transform_indices = @transform_2, window_bounds = array<i64: 1, 4, 16, 16>}]} {
    %cst = arith.constant 0.000000e+00 : f32
    %0 = vector.broadcast %cst : f32 to vector<4x1x16xf32>
    %cst_0 = arith.constant 0.000000e+00 : f32
    %1 = vector.broadcast %cst_0 : f32 to vector<4x16x1xf32>
    %c0_i32 = arith.constant 0 : i32
    %c0 = arith.constant 0 : index
    %2 = arith.index_cast %c0_i32 : i32 to index
    %c0_1 = arith.constant 0 : index
    %c0_2 = arith.constant 0 : index
    %3 = vector.load %arg2[%c0, %2, %c0_1, %c0_2] : memref<1x4x16x16xf32, #tpu.memory_space<vmem>>, vector<1x1x16x16xf32>
    %4 = vector.shape_cast %3 : vector<1x1x16x16xf32> to vector<16x16xf32>
    %5 = arith.index_cast %c0_i32 : i32 to index
    %c0_3 = arith.constant 0 : index
    %c0_4 = arith.constant 0 : index
    %c0_5 = arith.constant 0 : index
    %6 = vector.load %arg3[%5, %c0_3, %c0_4, %c0_5] : memref<4x4x16x16xf32, #tpu.memory_space<vmem>>, vector<1x4x16x16xf32>
    %7 = vector.shape_cast %6 : vector<1x4x16x16xf32> to vector<4x16x16xf32>
    %8 = vector.shape_cast %4 : vector<16x16xf32> to vector<1x16x16xf32>
    %9 = vector.broadcast %8 : vector<1x16x16xf32> to vector<4x16x16xf32>
    %10 = arith.mulf %9, %7 : vector<4x16x16xf32>
    %cst_6 = arith.constant dense<0.000000e+00> : vector<4x16xf32>
    %11 = vector.multi_reduction <add>, %10, %cst_6 [1] : vector<4x16x16xf32> to vector<4x16xf32>
    %12 = vector.shape_cast %11 : vector<4x16xf32> to vector<4x1x16xf32>
    %13 = arith.addf %0, %12 : vector<4x1x16xf32>
    %cst_7 = arith.constant dense<0.000000e+00> : vector<4x16xf32>
    %14 = vector.multi_reduction <add>, %10, %cst_7 [2] : vector<4x16x16xf32> to vector<4x16xf32>
    %15 = vector.shape_cast %14 : vector<4x16xf32> to vector<4x16x1xf32>
    %16 = arith.addf %1, %15 : vector<4x16x1xf32>
    %c1_i32 = arith.constant 1 : i32
    %c0_8 = arith.constant 0 : index
    %17 = arith.index_cast %c1_i32 : i32 to index
    %c0_9 = arith.constant 0 : index
    %c0_10 = arith.constant 0 : index
    %18 = vector.load %arg2[%c0_8, %17, %c0_9, %c0_10] : memref<1x4x16x16xf32, #tpu.memory_space<vmem>>, vector<1x1x16x16xf32>
    %19 = vector.shape_cast %18 : vector<1x1x16x16xf32> to vector<16x16xf32>
    %20 = arith.index_cast %c1_i32 : i32 to index
    %c0_11 = arith.constant 0 : index
    %c0_12 = arith.constant 0 : index
    %c0_13 = arith.constant 0 : index
    %21 = vector.load %arg3[%20, %c0_11, %c0_12, %c0_13] : memref<4x4x16x16xf32, #tpu.memory_space<vmem>>, vector<1x4x16x16xf32>
    %22 = vector.shape_cast %21 : vector<1x4x16x16xf32> to vector<4x16x16xf32>
    %23 = vector.shape_cast %19 : vector<16x16xf32> to vector<1x16x16xf32>
    %24 = vector.broadcast %23 : vector<1x16x16xf32> to vector<4x16x16xf32>
    %25 = arith.mulf %24, %22 : vector<4x16x16xf32>
    %cst_14 = arith.constant dense<0.000000e+00> : vector<4x16xf32>
    %26 = vector.multi_reduction <add>, %25, %cst_14 [1] : vector<4x16x16xf32> to vector<4x16xf32>
    %27 = vector.shape_cast %26 : vector<4x16xf32> to vector<4x1x16xf32>
    %28 = arith.addf %13, %27 : vector<4x1x16xf32>
    %cst_15 = arith.constant dense<0.000000e+00> : vector<4x16xf32>
    %29 = vector.multi_reduction <add>, %25, %cst_15 [2] : vector<4x16x16xf32> to vector<4x16xf32>
    %30 = vector.shape_cast %29 : vector<4x16xf32> to vector<4x16x1xf32>
    %31 = arith.addf %16, %30 : vector<4x16x1xf32>
    %c2_i32 = arith.constant 2 : i32
    %c0_16 = arith.constant 0 : index
    %32 = arith.index_cast %c2_i32 : i32 to index
    %c0_17 = arith.constant 0 : index
    %c0_18 = arith.constant 0 : index
    %33 = vector.load %arg2[%c0_16, %32, %c0_17, %c0_18] : memref<1x4x16x16xf32, #tpu.memory_space<vmem>>, vector<1x1x16x16xf32>
    %34 = vector.shape_cast %33 : vector<1x1x16x16xf32> to vector<16x16xf32>
    %35 = arith.index_cast %c2_i32 : i32 to index
    %c0_19 = arith.constant 0 : index
    %c0_20 = arith.constant 0 : index
    %c0_21 = arith.constant 0 : index
    %36 = vector.load %arg3[%35, %c0_19, %c0_20, %c0_21] : memref<4x4x16x16xf32, #tpu.memory_space<vmem>>, vector<1x4x16x16xf32>
    %37 = vector.shape_cast %36 : vector<1x4x16x16xf32> to vector<4x16x16xf32>
    %38 = vector.shape_cast %34 : vector<16x16xf32> to vector<1x16x16xf32>
    %39 = vector.broadcast %38 : vector<1x16x16xf32> to vector<4x16x16xf32>
    %40 = arith.mulf %39, %37 : vector<4x16x16xf32>
    %cst_22 = arith.constant dense<0.000000e+00> : vector<4x16xf32>
    %41 = vector.multi_reduction <add>, %40, %cst_22 [1] : vector<4x16x16xf32> to vector<4x16xf32>
    %42 = vector.shape_cast %41 : vector<4x16xf32> to vector<4x1x16xf32>
    %43 = arith.addf %28, %42 : vector<4x1x16xf32>
    %cst_23 = arith.constant dense<0.000000e+00> : vector<4x16xf32>
    %44 = vector.multi_reduction <add>, %40, %cst_23 [2] : vector<4x16x16xf32> to vector<4x16xf32>
    %45 = vector.shape_cast %44 : vector<4x16xf32> to vector<4x16x1xf32>
    %46 = arith.addf %31, %45 : vector<4x16x1xf32>
    %c3_i32 = arith.constant 3 : i32
    %c0_24 = arith.constant 0 : index
    %47 = arith.index_cast %c3_i32 : i32 to index
    %c0_25 = arith.constant 0 : index
    %c0_26 = arith.constant 0 : index
    %48 = vector.load %arg2[%c0_24, %47, %c0_25, %c0_26] : memref<1x4x16x16xf32, #tpu.memory_space<vmem>>, vector<1x1x16x16xf32>
    %49 = vector.shape_cast %48 : vector<1x1x16x16xf32> to vector<16x16xf32>
    %50 = arith.index_cast %c3_i32 : i32 to index
    %c0_27 = arith.constant 0 : index
    %c0_28 = arith.constant 0 : index
    %c0_29 = arith.constant 0 : index
    %51 = vector.load %arg3[%50, %c0_27, %c0_28, %c0_29] : memref<4x4x16x16xf32, #tpu.memory_space<vmem>>, vector<1x4x16x16xf32>
    %52 = vector.shape_cast %51 : vector<1x4x16x16xf32> to vector<4x16x16xf32>
    %53 = vector.shape_cast %49 : vector<16x16xf32> to vector<1x16x16xf32>
    %54 = vector.broadcast %53 : vector<1x16x16xf32> to vector<4x16x16xf32>
    %55 = arith.mulf %54, %52 : vector<4x16x16xf32>
    %cst_30 = arith.constant dense<0.000000e+00> : vector<4x16xf32>
    %56 = vector.multi_reduction <add>, %55, %cst_30 [1] : vector<4x16x16xf32> to vector<4x16xf32>
    %57 = vector.shape_cast %56 : vector<4x16xf32> to vector<4x1x16xf32>
    %58 = arith.addf %43, %57 : vector<4x1x16xf32>
    %cst_31 = arith.constant dense<0.000000e+00> : vector<4x16xf32>
    %59 = vector.multi_reduction <add>, %55, %cst_31 [2] : vector<4x16x16xf32> to vector<4x16xf32>
    %60 = vector.shape_cast %59 : vector<4x16xf32> to vector<4x16x1xf32>
    %61 = arith.addf %46, %60 : vector<4x16x1xf32>
    %c4_i32 = arith.constant 4 : i32
    %62 = vector.broadcast %58 : vector<4x1x16xf32> to vector<4x16x16xf32>
    %63 = vector.broadcast %61 : vector<4x16x1xf32> to vector<4x16x16xf32>
    %64 = arith.addf %62, %63 : vector<4x16x16xf32>
    %c0_32 = arith.constant 0 : index
    %c0_33 = arith.constant 0 : index
    %c0_34 = arith.constant 0 : index
    %c0_35 = arith.constant 0 : index
    %65 = vector.load %arg4[%c0_32, %c0_33, %c0_34, %c0_35] : memref<1x4x16x16xf32, #tpu.memory_space<vmem>>, vector<1x4x16x16xf32>
    %66 = vector.shape_cast %65 : vector<1x4x16x16xf32> to vector<4x16x16xf32>
    %67 = vector.shape_cast %64 : vector<4x16x16xf32> to vector<1x4x16x16xf32>
    tpu.vector_store %arg4[%c0_32, %c0_33, %c0_34, %c0_35], %67 {strides = array<i32>} : memref<1x4x16x16xf32, #tpu.memory_space<vmem>>, vector<1x4x16x16xf32>,
    return
  }
  func.func @transform_0(%arg0: i32, %arg1: i32) -> (i32, i32, i32, i32) {
    %c0_i32 = arith.constant 0 : i32
    %c0_i32_0 = arith.constant 0 : i32
    %c0_i32_1 = arith.constant 0 : i32
    %c0_i32_2 = arith.constant 0 : i32
    return %arg1, %c0_i32, %c0_i32_0, %c0_i32_1 : i32, i32, i32, i32
  }
  func.func @transform_1(%arg0: i32, %arg1: i32) -> (i32, i32, i32, i32) {
    %c0_i32 = arith.constant 0 : i32
    %c0_i32_0 = arith.constant 0 : i32
    %c0_i32_1 = arith.constant 0 : i32
    %c0_i32_2 = arith.constant 0 : i32
    return %c0_i32, %arg0, %c0_i32_0, %c0_i32_1 : i32, i32, i32, i32
  }
  func.func @transform_2(%arg0: i32, %arg1: i32) -> (i32, i32, i32, i32) {
    %c0_i32 = arith.constant 0 : i32
    %c0_i32_0 = arith.constant 0 : i32
    %c0_i32_1 = arith.constant 0 : i32
    return %arg1, %arg0, %c0_i32, %c0_i32_0 : i32, i32, i32, i32
  }
}

</mosaic_0001>

<llo_original>
// kernel: tpu_custom_call.1
$region0: #{tpu_custom_call.1}
  #allocation0 [shape = 'u32[]', space=smem, size = 0x4, offset = 0x4, fixed_abs, tag = 'smem constant byte address 0x4 - core index']
  #allocation1 [shape = 'u32[144,128]{1,0:T(1,128)}', space=vmem, size = 0x12000, scoped, tag = 'internal scratch']
  %s0 = inlined_call_operand.hbm [shape: f32[2,4,16,16], index: 0, kind: input, shape index: {}]
  %s1 = inlined_call_operand.hbm [shape: f32[4,4,16,16], index: 1, kind: input, shape index: {}]
  %s2 = inlined_call_operand.hbm [shape: f32[2,4,16,16], index: 2, kind: output, shape index: {}]
  %s3 = sld [smem:[#allocation0]]
  $region49: #{tpu_custom_call.1} parent=0
    _
  %s5 = ssub.s32 1, %s3
  %s6 = scalar_select 0, %s5, %s3
  $region1: #{tpu_custom_call.1} parent=0
    #allocation2 [shape = 'u8[65536]{0}', space=vmem, size = 0x10000, scoped, tag = 'input window, operand 0']
    #allocation3 [shape = 's32[2]{0}', space=sflag, size = 0x8, scoped, tag = 'scoped memory for tpu_custom_call.1']
    #allocation4 [shape = 's32[2]{0}', space=sflag, size = 0x8, scoped, tag = 'scoped memory for tpu_custom_call.1']
    #allocation5 [shape = 'u8[131072]{0}', space=vmem, size = 0x20000, scoped, tag = 'input window, operand 1, single buffered']
    #allocation6 [shape = 's32[1]{0}', space=sflag, size = 0x4, scoped, tag = 'scoped memory for tpu_custom_call.1']
    #allocation7 [shape = 'u8[65536]{0}', space=vmem, size = 0x10000, scoped, tag = 'output window, operand 0']
    %7 = vsyncpa [#allocation3], 0
    %s8 = scalar_lea.sflag [#allocation3], 1
    %9 = vsyncpa %s8, 0
    %10 = vsyncpa [#allocation6], 0
    %11 = vsyncpa [#allocation4], 0
    %s12 = scalar_lea.sflag [#allocation4], 1
    %13 = vsyncpa %s12, 0
    loop: start=0, step=1, limit=4
    $region2: #{tpu_custom_call.1} parent=1 // loop_pre_header
      _
    $region3: #{tpu_custom_call.1} parent=1 // loop_header
      %s15 = sphi 0, %s19
      %p16 = scmp.ge.s32.totalorder %s15, 4
      %s22 = sphi 0, %s34
      %s23 = sphi 0, %s30
      %s24 = sphi 0, %s22
      %s25 = sphi 0, %s23
      %s26 = sphi 0, %s24
      %s27 = sphi 0, %s25
      %s37 = sphi 0, %s39
      %s40 = sphi 0, %s37
      %s41 = sphi 0, %s40
      %s57 = sphi 0, %s41
      %s63 = sphi 0, %s65
      %s66 = sphi 0, %s63
      %s67 = sphi 0, %s66
      %s83 = sphi 0, %s67
      %s91 = sphi 0, %s93
      %s94 = sphi 0, %s91
      %s95 = sphi 0, %s94
      %s111 = sphi 0, %s95
    $region4: #{tpu_custom_call.1} parent=1 // loop_header_branch
      %18 = sbr.rel (%p16) target = $region8
    $region5: #{tpu_custom_call.1} parent=1 // loop_body
      %s20 = ssub.s32 %s15, 1
      %s21 = ssub.s32 %s15, 2
      %s28 = sadd.s32 1, %s23
      %p29 = scmp.ge.s32.totalorder %s28, 2
      %s30 = scalar_select %p29, 0, %s28
      %s31 = sadd.s32 1, %s22
      %s32 = scalar_select %p29, %s31, %s22
      %p33 = scmp.ge.s32.totalorder %s32, 1
      %s34 = scalar_select %p33, 0, %s32
      %s35 = ssub.s32 %s23, %s30
      %p36 = scmp.eq.s32.totalorder %s35, 0
      %s38 = sadd.s32 %s37, 1
      %s39 = scalar_select %p36, %s37, %s38
      %p42 = pneg %p36
      %p43 = scmp.eq.s32.totalorder %s15, 1
      %p44 = por %p42, %p43
      %p45 = scmp.ne.s32.totalorder %s37, %s40
      %p46 = scmp.eq.s32.totalorder %s15, 0
      %p47 = por %p45, %p46
      %p48 = scmp.ne.s32.totalorder %s37, %s40
      %p49 = scmp.eq.s32.totalorder %s20, 1
      %p50 = por %p48, %p49
      %p51 = scmp.ne.s32.totalorder %s40, %s41
      %p52 = scmp.eq.s32.totalorder %s20, 0
      %p53 = por %p51, %p52
      %p54 = scmp.ne.s32.totalorder %s40, %s41
      %p55 = scmp.eq.s32.totalorder %s21, 1
      %p56 = por %p54, %p55
      %p58 = scmp.ne.s32.totalorder %s41, %s57
      %p59 = scmp.eq.s32.totalorder %s21, 0
      %p60 = por %p58, %p59
      %s61 = ssub.s32 %s22, %s34
      %p62 = scmp.eq.s32.totalorder %s61, 0
      %s64 = sadd.s32 %s63, 1
      %s65 = scalar_select %p62, %s63, %s64
      %p68 = pneg %p62
      %p69 = scmp.eq.s32.totalorder %s15, 1
      %p70 = por %p68, %p69
      %p71 = scmp.ne.s32.totalorder %s63, %s66
      %p72 = scmp.eq.s32.totalorder %s15, 0
      %p73 = por %p71, %p72
      %p74 = scmp.ne.s32.totalorder %s63, %s66
      %p75 = scmp.eq.s32.totalorder %s20, 1
      %p76 = por %p74, %p75
      %p77 = scmp.ne.s32.totalorder %s66, %s67
      %p78 = scmp.eq.s32.totalorder %s20, 0
      %p79 = por %p77, %p78
      %p80 = scmp.ne.s32.totalorder %s66, %s67
      %p81 = scmp.eq.s32.totalorder %s21, 1
      %p82 = por %p80, %p81
      %p84 = scmp.ne.s32.totalorder %s67, %s83
      %p85 = scmp.eq.s32.totalorder %s21, 0
      %p86 = por %p84, %p85
      %s87 = ssub.s32 %s23, %s30
      %s88 = ssub.s32 %s22, %s34
      %s89 = sor.u32 %s87, %s88
      %p90 = scmp.eq.s32.totalorder %s89, 0
      %s92 = sadd.s32 %s91, 1
      %s93 = scalar_select %p90, %s91, %s92
      %p96 = pneg %p90
      %p97 = scmp.eq.s32.totalorder %s15, 1
      %p98 = por %p96, %p97
      %p99 = scmp.ne.s32.totalorder %s91, %s94
      %p100 = scmp.eq.s32.totalorder %s15, 0
      %p101 = por %p99, %p100
      %p102 = scmp.ne.s32.totalorder %s91, %s94
      %p103 = scmp.eq.s32.totalorder %s20, 1
      %p104 = por %p102, %p103
      %p105 = scmp.ne.s32.totalorder %s94, %s95
      %p106 = scmp.eq.s32.totalorder %s20, 0
      %p107 = por %p105, %p106
      %p108 = scmp.ne.s32.totalorder %s94, %s95
      %p109 = scmp.eq.s32.totalorder %s21, 1
      %p110 = por %p108, %p109
      %p112 = scmp.ne.s32.totalorder %s95, %s111
      %p113 = scmp.eq.s32.totalorder %s21, 0
      %p114 = por %p112, %p113
      %p115 = scmp.le.s32.totalorder 1, %s15
      %p116 = scmp.lt.s32.totalorder %s15, 3
      %p117 = pnand %p115, %p116
      %p118 = pneg %p117
      // Predicated region
      $region9: #{tpu_custom_call.1} parent=5 // pred_check
        _
      $region10: #{tpu_custom_call.1} parent=5 // pred_check_branch
        %120 = sbr.rel (%p117) target = $region12
      $region11: #{tpu_custom_call.1} parent=5 // pred_region
        %s121 = ssub.s32 %s15, 1
        // Predicated region
        $region13: #{tpu_custom_call.1} parent=11 // pred_check
          %p122 = pneg %p79
        $region14: #{tpu_custom_call.1} parent=11 // pred_check_branch
          %124 = sbr.rel (%p122) target = $region16
        $region15: #{tpu_custom_call.1} parent=11 // pred_region
          %s125 = smul.u32 4, %s24
          %s127 = ssub.s32 4096, 4096
          %128 = vsyncadd [#allocation6], %s127
          %s129 = smul.addr %s125, 2
          %s130 = smul.addr %s129, 128
          %s131 = scalar_lea.hbm %s1, %s130
          %s132 = sshll.u32 [#allocation5], 4
          %s133 = int_to_ptr.vmem [resolvable:$true] %s132
          %138 = dma.hbm_to_vmem [thread:$0]  %s131, 4096, %s133, [#allocation6], 128, 128, 8
        $region16: #{tpu_custom_call.1} parent=11 // pred_fallthru
          _
      $region12: #{tpu_custom_call.1} parent=5 // pred_fallthru
        _
      %p139 = scmp.lt.s32.totalorder %s15, 2
      // Predicated region
      $region17: #{tpu_custom_call.1} parent=5 // pred_check
        %p140 = pneg %p139
      $region18: #{tpu_custom_call.1} parent=5 // pred_check_branch
        %142 = sbr.rel (%p140) target = $region20
      $region19: #{tpu_custom_call.1} parent=5 // pred_region
        // Predicated region
        $region21: #{tpu_custom_call.1} parent=19 // pred_check
          %p143 = pneg %p47
        $region22: #{tpu_custom_call.1} parent=19 // pred_check_branch
          %145 = sbr.rel (%p143) target = $region24
        $region23: #{tpu_custom_call.1} parent=19 // pred_region
          %s146 = sand.u32 %s37, 1
          %s147 = scalar_lea.sflag [#allocation3], %s146
          %s148 = sand.u32 %s37, 1
          %s149 = smul.addr %s148, 64
          %s150 = scalar_lea.vmem [#allocation2], %s149
          %s152 = ssub.s32 1024, 1024
          %153 = vsyncadd %s147, %s152
          %s154 = smul.addr %s23, 8
          %s155 = smul.addr %s154, 128
          %s156 = scalar_lea.hbm %s0, %s155
          %s157 = sshll.u32 %s150, 4
          %s158 = int_to_ptr.vmem [resolvable:$true] %s157
          %163 = dma.hbm_to_vmem [thread:$0]  %s156, 1024, %s158, %s147, 128, 128, 8
        $region24: #{tpu_custom_call.1} parent=19 // pred_fallthru
          _
      $region20: #{tpu_custom_call.1} parent=5 // pred_fallthru
        _
      %p164 = scmp.le.s32.totalorder 1, %s15
      %p165 = scmp.lt.s32.totalorder %s15, 3
      %p166 = pnand %p164, %p165
      %p167 = pneg %p166
      // Predicated region
      $region25: #{tpu_custom_call.1} parent=5 // pred_check
        _
      $region26: #{tpu_custom_call.1} parent=5 // pred_check_branch
        %169 = sbr.rel (%p166) target = $region28
      $region27: #{tpu_custom_call.1} parent=5 // pred_region
        %s170 = ssub.s32 %s15, 1
        %s171 = sand.u32 %s40, 1
        %s172 = scalar_lea.sflag [#allocation3], %s171
        %s173 = sand.u32 %s40, 1
        %s174 = smul.addr %s173, 64
        %s175 = scalar_lea.vmem [#allocation2], %s174
        // Predicated region
        $region29: #{tpu_custom_call.1} parent=27 // pred_check
          %p176 = pneg %p53
        $region30: #{tpu_custom_call.1} parent=27 // pred_check_branch
          %178 = sbr.rel (%p176) target = $region32
        $region31: #{tpu_custom_call.1} parent=27 // pred_region
          %179 = dma.done %s172, 1024
        $region32: #{tpu_custom_call.1} parent=27 // pred_fallthru
          _
        // Predicated region
        $region33: #{tpu_custom_call.1} parent=27 // pred_check
          %p180 = pneg %p79
        $region34: #{tpu_custom_call.1} parent=27 // pred_check_branch
          %182 = sbr.rel (%p180) target = $region36
        $region35: #{tpu_custom_call.1} parent=27 // pred_region
          %183 = dma.done [#allocation6], 4096
        $region36: #{tpu_custom_call.1} parent=27 // pred_fallthru
          _
        %s184 = sand.u32 %s40, 1
        %s185 = scalar_lea.sflag [#allocation3], %s184
        %s186 = sand.u32 %s40, 1
        %s187 = smul.addr %s186, 64
        %s188 = scalar_lea.vmem [#allocation2], %s187
        %p189 = pneg %p53
        %p190 = pneg %p50
        %p191 = pneg %p79
        %p192 = pneg %p76
        %p193 = pneg %p107
        %p194 = pneg %p104
        %s195 = sand.u32 %s94, 1
        %s196 = scalar_lea.sflag [#allocation4], %s195
        %s197 = sand.u32 %s94, 1
        %s198 = smul.addr %s197, 64
        %s199 = scalar_lea.vmem [#allocation7], %s198
        %s200 = smul.u32 4, %s24
        %s201 = smul.u32 4, %s24
        %v202 = vld [vmem:[%s175] sm:$0xff]
        %v203 = vld [vmem:[%s175 + $0x8] sm:$0xff]
        %v204 = vld [vmem:[#allocation5] sm:$0xff]
        %v205 = vld [vmem:[#allocation5 + $0x8] sm:$0xff]
        %v206 = vld [vmem:[#allocation5 + $0x10] sm:$0xff]
        %v207 = vld [vmem:[#allocation5 + $0x18] sm:$0xff]
        %v208 = vld [vmem:[#allocation5 + $0x20] sm:$0xff]
        %v209 = vld [vmem:[#allocation5 + $0x28] sm:$0xff]
        %v210 = vld [vmem:[#allocation5 + $0x30] sm:$0xff]
        %v211 = vld [vmem:[#allocation5 + $0x38] sm:$0xff]
        %v212 = vmul.f32 %v202, %v204
        %v213 = vmul.f32 %v203, %v205
        %v214 = vmul.f32 %v202, %v206
        %v215 = vmul.f32 %v203, %v207
        %v216 = vmul.f32 %v202, %v208
        %v217 = vmul.f32 %v203, %v209
        %v218 = vmul.f32 %v202, %v210
        %v219 = vmul.f32 %v203, %v211
        %vm220 = vcmask 130048
        %v221 = vsel %vm220, %v212, 0.0
        %v222 = vsel %vm220, %v213, 0.0
        %v223 = vadd.f32 %v221, %v222
        %v224 = vrot.slane %v223, 4
        %v225 = vadd.f32 %v223, %v224
        %v226 = vrot.slane %v225, 2
        %v227 = vadd.f32 %v225, %v226
        %v228 = vrot.slane %v227, 1
        %v229 = vadd.f32 %v227, %v228
        %v230 = vsel %vm220, %v214, 0.0
        %v231 = vsel %vm220, %v215, 0.0
        %v232 = vadd.f32 %v230, %v231
        %v233 = vrot.slane %v232, 4
        %v234 = vadd.f32 %v232, %v233
        %v235 = vrot.slane %v234, 2
        %v236 = vadd.f32 %v234, %v235
        %v237 = vrot.slane %v236, 1
        %v238 = vadd.f32 %v236, %v237
        %v239 = vsel %vm220, %v216, 0.0
        %v240 = vsel %vm220, %v217, 0.0
        %v241 = vadd.f32 %v239, %v240
        %v242 = vrot.slane %v241, 4
        %v243 = vadd.f32 %v241, %v242
        %v244 = vrot.slane %v243, 2
        %v245 = vadd.f32 %v243, %v244
        %v246 = vrot.slane %v245, 1
        %v247 = vadd.f32 %v245, %v246
        %v248 = vsel %vm220, %v218, 0.0
        %v249 = vsel %vm220, %v219, 0.0
        %v250 = vadd.f32 %v248, %v249
        %v251 = vrot.slane %v250, 4
        %v252 = vadd.f32 %v250, %v251
        %v253 = vrot.slane %v252, 2
        %v254 = vadd.f32 %v252, %v253
        %v255 = vrot.slane %v254, 1
        %v256 = vadd.f32 %v254, %v255
        %v257 = vadd.f32 %v229, 0.0
        %v258 = vadd.f32 %v238, 0.0
        %v259 = vadd.f32 %v247, 0.0
        %v260 = vadd.f32 %v256, 0.0
        %261 = vadd.xlane.f32.xlu0 %v221
        %v262 = vpop.xlane.xlu0 %261
        %263 = vadd.xlane.f32.xlu0 %v222
        %v264 = vpop.xlane.xlu0 %263
        %265 = vadd.xlane.f32.xlu0 %v230
        %v266 = vpop.xlane.xlu0 %265
        %267 = vadd.xlane.f32.xlu0 %v231
        %v268 = vpop.xlane.xlu0 %267
        %269 = vadd.xlane.f32.xlu0 %v239
        %v270 = vpop.xlane.xlu0 %269
        %271 = vadd.xlane.f32.xlu0 %v240
        %v272 = vpop.xlane.xlu0 %271
        %273 = vadd.xlane.f32.xlu0 %v248
        %v274 = vpop.xlane.xlu0 %273
        %275 = vadd.xlane.f32.xlu0 %v249
        %v276 = vpop.xlane.xlu0 %275
        %v277 = vadd.f32 %v262, 0.0
        %v278 = vadd.f32 %v264, 0.0
        %v279 = vadd.f32 %v266, 0.0
        %v280 = vadd.f32 %v268, 0.0
        %v281 = vadd.f32 %v270, 0.0
        %v282 = vadd.f32 %v272, 0.0
        %v283 = vadd.f32 %v274, 0.0
        %v284 = vadd.f32 %v276, 0.0
        %s285 = scalar_lea.vmem %s175, 16 [#allocation2]
        %v286 = vld [vmem:[%s285] sm:$0xff]
        %v287 = vld [vmem:[%s285 + $0x8] sm:$0xff]
        %s288 = scalar_lea.vmem [#allocation5], 64
        %v289 = vld [vmem:[%s288] sm:$0xff]
        %v290 = vld [vmem:[%s288 + $0x8] sm:$0xff]
        %v291 = vld [vmem:[%s288 + $0x10] sm:$0xff]
        %v292 = vld [vmem:[%s288 + $0x18] sm:$0xff]
        %v293 = vld [vmem:[%s288 + $0x20] sm:$0xff]
        %v294 = vld [vmem:[%s288 + $0x28] sm:$0xff]
        %v295 = vld [vmem:[%s288 + $0x30] sm:$0xff]
        %v296 = vld [vmem:[%s288 + $0x38] sm:$0xff]
        %v297 = vmul.f32 %v286, %v289
        %v298 = vmul.f32 %v287, %v290
        %v299 = vmul.f32 %v286, %v291
        %v300 = vmul.f32 %v287, %v292
        %v301 = vmul.f32 %v286, %v293
        %v302 = vmul.f32 %v287, %v294
        %v303 = vmul.f32 %v286, %v295
        %v304 = vmul.f32 %v287, %v296
        %v305 = vsel %vm220, %v297, 0.0
        %v306 = vsel %vm220, %v298, 0.0
        %v307 = vadd.f32 %v305, %v306
        %v308 = vrot.slane %v307, 4
        %v309 = vadd.f32 %v307, %v308
        %v310 = vrot.slane %v309, 2
        %v311 = vadd.f32 %v309, %v310
        %v312 = vrot.slane %v311, 1
        %v313 = vadd.f32 %v311, %v312
        %v314 = vsel %vm220, %v299, 0.0
        %v315 = vsel %vm220, %v300, 0.0
        %v316 = vadd.f32 %v314, %v315
        %v317 = vrot.slane %v316, 4
        %v318 = vadd.f32 %v316, %v317
        %v319 = vrot.slane %v318, 2
        %v320 = vadd.f32 %v318, %v319
        %v321 = vrot.slane %v320, 1
        %v322 = vadd.f32 %v320, %v321
        %v323 = vsel %vm220, %v301, 0.0
        %v324 = vsel %vm220, %v302, 0.0
        %v325 = vadd.f32 %v323, %v324
        %v326 = vrot.slane %v325, 4
        %v327 = vadd.f32 %v325, %v326
        %v328 = vrot.slane %v327, 2
        %v329 = vadd.f32 %v327, %v328
        %v330 = vrot.slane %v329, 1
        %v331 = vadd.f32 %v329, %v330
        %v332 = vsel %vm220, %v303, 0.0
        %v333 = vsel %vm220, %v304, 0.0
        %v334 = vadd.f32 %v332, %v333
        %v335 = vrot.slane %v334, 4
        %v336 = vadd.f32 %v334, %v335
        %v337 = vrot.slane %v336, 2
        %v338 = vadd.f32 %v336, %v337
        %v339 = vrot.slane %v338, 1
        %v340 = vadd.f32 %v338, %v339
        %v341 = vadd.f32 %v257, %v313
        %v342 = vadd.f32 %v258, %v322
        %v343 = vadd.f32 %v259, %v331
        %v344 = vadd.f32 %v260, %v340
        %345 = vadd.xlane.f32.xlu0 %v305
        %v346 = vpop.xlane.xlu0 %345
        %347 = vadd.xlane.f32.xlu0 %v306
        %v348 = vpop.xlane.xlu0 %347
        %349 = vadd.xlane.f32.xlu0 %v314
        %v350 = vpop.xlane.xlu0 %349
        %351 = vadd.xlane.f32.xlu0 %v315
        %v352 = vpop.xlane.xlu0 %351
        %353 = vadd.xlane.f32.xlu0 %v323
        %v354 = vpop.xlane.xlu0 %353
        %355 = vadd.xlane.f32.xlu0 %v324
        %v356 = vpop.xlane.xlu0 %355
        %357 = vadd.xlane.f32.xlu0 %v332
        %v358 = vpop.xlane.xlu0 %357
        %359 = vadd.xlane.f32.xlu0 %v333
        %v360 = vpop.xlane.xlu0 %359
        %v361 = vadd.f32 %v277, %v346
        %v362 = vadd.f32 %v278, %v348
        %v363 = vadd.f32 %v279, %v350
        %v364 = vadd.f32 %v280, %v352
        %v365 = vadd.f32 %v281, %v354
        %v366 = vadd.f32 %v282, %v356
        %v367 = vadd.f32 %v283, %v358
        %v368 = vadd.f32 %v284, %v360
        %s369 = scalar_lea.vmem %s175, 32 [#allocation2]
        %v370 = vld [vmem:[%s369] sm:$0xff]
        %v371 = vld [vmem:[%s369 + $0x8] sm:$0xff]
        %s372 = scalar_lea.vmem [#allocation5], 128
        %v373 = vld [vmem:[%s372] sm:$0xff]
        %v374 = vld [vmem:[%s372 + $0x8] sm:$0xff]
        %v375 = vld [vmem:[%s372 + $0x10] sm:$0xff]
        %v376 = vld [vmem:[%s372 + $0x18] sm:$0xff]
        %v377 = vld [vmem:[%s372 + $0x20] sm:$0xff]
        %v378 = vld [vmem:[%s372 + $0x28] sm:$0xff]
        %v379 = vld [vmem:[%s372 + $0x30] sm:$0xff]
        %v380 = vld [vmem:[%s372 + $0x38] sm:$0xff]
        %v381 = vmul.f32 %v370, %v373
        %v382 = vmul.f32 %v371, %v374
        %v383 = vmul.f32 %v370, %v375
        %v384 = vmul.f32 %v371, %v376
        %v385 = vmul.f32 %v370, %v377
        %v386 = vmul.f32 %v371, %v378
        %v387 = vmul.f32 %v370, %v379
        %v388 = vmul.f32 %v371, %v380
        %v389 = vsel %vm220, %v381, 0.0
        %v390 = vsel %vm220, %v382, 0.0
        %v391 = vadd.f32 %v389, %v390
        %v392 = vrot.slane %v391, 4
        %v393 = vadd.f32 %v391, %v392
        %v394 = vrot.slane %v393, 2
        %v395 = vadd.f32 %v393, %v394
        %v396 = vrot.slane %v395, 1
        %v397 = vadd.f32 %v395, %v396
        %v398 = vsel %vm220, %v383, 0.0
        %v399 = vsel %vm220, %v384, 0.0
        %v400 = vadd.f32 %v398, %v399
        %v401 = vrot.slane %v400, 4
        %v402 = vadd.f32 %v400, %v401
        %v403 = vrot.slane %v402, 2
        %v404 = vadd.f32 %v402, %v403
        %v405 = vrot.slane %v404, 1
        %v406 = vadd.f32 %v404, %v405
        %v407 = vsel %vm220, %v385, 0.0
        %v408 = vsel %vm220, %v386, 0.0
        %v409 = vadd.f32 %v407, %v408
        %v410 = vrot.slane %v409, 4
        %v411 = vadd.f32 %v409, %v410
        %v412 = vrot.slane %v411, 2
        %v413 = vadd.f32 %v411, %v412
        %v414 = vrot.slane %v413, 1
        %v415 = vadd.f32 %v413, %v414
        %v416 = vsel %vm220, %v387, 0.0
        %v417 = vsel %vm220, %v388, 0.0
        %v418 = vadd.f32 %v416, %v417
        %v419 = vrot.slane %v418, 4
        %v420 = vadd.f32 %v418, %v419
        %v421 = vrot.slane %v420, 2
        %v422 = vadd.f32 %v420, %v421
        %v423 = vrot.slane %v422, 1
        %v424 = vadd.f32 %v422, %v423
        %v425 = vadd.f32 %v341, %v397
        %v426 = vadd.f32 %v342, %v406
        %v427 = vadd.f32 %v343, %v415
        %v428 = vadd.f32 %v344, %v424
        %429 = vadd.xlane.f32.xlu0 %v389
        %v430 = vpop.xlane.xlu0 %429
        %431 = vadd.xlane.f32.xlu0 %v390
        %v432 = vpop.xlane.xlu0 %431
        %433 = vadd.xlane.f32.xlu0 %v398
        %v434 = vpop.xlane.xlu0 %433
        %435 = vadd.xlane.f32.xlu0 %v399
        %v436 = vpop.xlane.xlu0 %435
        %437 = vadd.xlane.f32.xlu0 %v407
        %v438 = vpop.xlane.xlu0 %437
        %439 = vadd.xlane.f32.xlu0 %v408
        %v440 = vpop.xlane.xlu0 %439
        %441 = vadd.xlane.f32.xlu0 %v416
        %v442 = vpop.xlane.xlu0 %441
        %443 = vadd.xlane.f32.xlu0 %v417
        %v444 = vpop.xlane.xlu0 %443
        %v445 = vadd.f32 %v361, %v430
        %v446 = vadd.f32 %v362, %v432
        %v447 = vadd.f32 %v363, %v434
        %v448 = vadd.f32 %v364, %v436
        %v449 = vadd.f32 %v365, %v438
        %v450 = vadd.f32 %v366, %v440
        %v451 = vadd.f32 %v367, %v442
        %v452 = vadd.f32 %v368, %v444
        %s453 = scalar_lea.vmem %s175, 48 [#allocation2]
        %v454 = vld [vmem:[%s453] sm:$0xff]
        %v455 = vld [vmem:[%s453 + $0x8] sm:$0xff]
        %s456 = scalar_lea.vmem [#allocation5], 192
        %v457 = vld [vmem:[%s456] sm:$0xff]
        %v458 = vld [vmem:[%s456 + $0x8] sm:$0xff]
        %v459 = vld [vmem:[%s456 + $0x10] sm:$0xff]
        %v460 = vld [vmem:[%s456 + $0x18] sm:$0xff]
        %v461 = vld [vmem:[%s456 + $0x20] sm:$0xff]
        %v462 = vld [vmem:[%s456 + $0x28] sm:$0xff]
        %v463 = vld [vmem:[%s456 + $0x30] sm:$0xff]
        %v464 = vld [vmem:[%s456 + $0x38] sm:$0xff]
        %v465 = vmul.f32 %v454, %v457
        %v466 = vmul.f32 %v455, %v458
        %v467 = vmul.f32 %v454, %v459
        %v468 = vmul.f32 %v455, %v460
        %v469 = vmul.f32 %v454, %v461
        %v470 = vmul.f32 %v455, %v462
        %v471 = vmul.f32 %v454, %v463
        %v472 = vmul.f32 %v455, %v464
        %v473 = vsel %vm220, %v465, 0.0
        %v474 = vsel %vm220, %v466, 0.0
        %v475 = vadd.f32 %v473, %v474
        %v476 = vrot.slane %v475, 4
        %v477 = vadd.f32 %v475, %v476
        %v478 = vrot.slane %v477, 2
        %v479 = vadd.f32 %v477, %v478
        %v480 = vrot.slane %v479, 1
        %v481 = vadd.f32 %v479, %v480
        %v482 = vsel %vm220, %v467, 0.0
        %v483 = vsel %vm220, %v468, 0.0
        %v484 = vadd.f32 %v482, %v483
        %v485 = vrot.slane %v484, 4
        %v486 = vadd.f32 %v484, %v485
        %v487 = vrot.slane %v486, 2
        %v488 = vadd.f32 %v486, %v487
        %v489 = vrot.slane %v488, 1
        %v490 = vadd.f32 %v488, %v489
        %v491 = vsel %vm220, %v469, 0.0
        %v492 = vsel %vm220, %v470, 0.0
        %v493 = vadd.f32 %v491, %v492
        %v494 = vrot.slane %v493, 4
        %v495 = vadd.f32 %v493, %v494
        %v496 = vrot.slane %v495, 2
        %v497 = vadd.f32 %v495, %v496
        %v498 = vrot.slane %v497, 1
        %v499 = vadd.f32 %v497, %v498
        %v500 = vsel %vm220, %v471, 0.0
        %v501 = vsel %vm220, %v472, 0.0
        %v502 = vadd.f32 %v500, %v501
        %v503 = vrot.slane %v502, 4
        %v504 = vadd.f32 %v502, %v503
        %v505 = vrot.slane %v504, 2
        %v506 = vadd.f32 %v504, %v505
        %v507 = vrot.slane %v506, 1
        %v508 = vadd.f32 %v506, %v507
        %v509 = vadd.f32 %v425, %v481
        %v510 = vadd.f32 %v426, %v490
        %v511 = vadd.f32 %v427, %v499
        %v512 = vadd.f32 %v428, %v508
        %513 = vadd.xlane.f32.xlu0 %v473
        %v514 = vpop.xlane.xlu0 %513
        %515 = vadd.xlane.f32.xlu0 %v474
        %v516 = vpop.xlane.xlu0 %515
        %517 = vadd.xlane.f32.xlu0 %v482
        %v518 = vpop.xlane.xlu0 %517
        %519 = vadd.xlane.f32.xlu0 %v483
        %v520 = vpop.xlane.xlu0 %519
        %521 = vadd.xlane.f32.xlu0 %v491
        %v522 = vpop.xlane.xlu0 %521
        %523 = vadd.xlane.f32.xlu0 %v492
        %v524 = vpop.xlane.xlu0 %523
        %525 = vadd.xlane.f32.xlu0 %v500
        %v526 = vpop.xlane.xlu0 %525
        %527 = vadd.xlane.f32.xlu0 %v501
        %v528 = vpop.xlane.xlu0 %527
        %v529 = vadd.f32 %v445, %v514
        %v530 = vadd.f32 %v446, %v516
        %v531 = vadd.f32 %v447, %v518
        %v532 = vadd.f32 %v448, %v520
        %v533 = vadd.f32 %v449, %v522
        %v534 = vadd.f32 %v450, %v524
        %v535 = vadd.f32 %v451, %v526
        %v536 = vadd.f32 %v452, %v528
        %v537 = vadd.f32 %v509, %v529
        %v538 = vadd.f32 %v509, %v530
        %v539 = vadd.f32 %v510, %v531
        %v540 = vadd.f32 %v510, %v532
        %v541 = vadd.f32 %v511, %v533
        %v542 = vadd.f32 %v511, %v534
        %v543 = vadd.f32 %v512, %v535
        %v544 = vadd.f32 %v512, %v536
        %545 = vst.msk [vmem:[%s199] sm:$0xff] %vm220, %v537
        %546 = vst.msk [vmem:[%s199 + $0x8] sm:$0xff] %vm220, %v538
        %547 = vst.msk [vmem:[%s199 + $0x10] sm:$0xff] %vm220, %v539
        %548 = vst.msk [vmem:[%s199 + $0x18] sm:$0xff] %vm220, %v540
        %549 = vst.msk [vmem:[%s199 + $0x20] sm:$0xff] %vm220, %v541
        %550 = vst.msk [vmem:[%s199 + $0x28] sm:$0xff] %vm220, %v542
        %551 = vst.msk [vmem:[%s199 + $0x30] sm:$0xff] %vm220, %v543
        %552 = vst.msk [vmem:[%s199 + $0x38] sm:$0xff] %vm220, %v544
        %s553 = sand.u32 %s94, 1
        %s554 = scalar_lea.sflag [#allocation4], %s553
        %s555 = sand.u32 %s94, 1
        %s556 = smul.addr %s555, 64
        %s557 = scalar_lea.vmem [#allocation7], %s556
        // Predicated region
        $region37: #{tpu_custom_call.1} parent=27 // pred_check
          %p558 = pneg %p104
        $region38: #{tpu_custom_call.1} parent=27 // pred_check_branch
          %560 = sbr.rel (%p558) target = $region40
        $region39: #{tpu_custom_call.1} parent=27 // pred_region
          %s561 = smul.u32 4, %s24
          %s563 = ssub.s32 1024, 1024
          %564 = vsyncadd %s554, %s563
          %s565 = smul.addr %s561, 2
          %s566 = smul.addr %s25, 8
          %s567 = sadd.s32 %s565, %s566
          %s568 = smul.addr %s567, 128
          %s569 = scalar_lea.hbm %s2, %s568
          %s570 = sshll.u32 %s557, 4
          %s571 = int_to_ptr.vmem [resolvable:$true] %s570
          %576 = dma.vmem_to_hbm [thread:$0]  %s571, 1024, %s569, %s554, 128, 128, 8
        $region40: #{tpu_custom_call.1} parent=27 // pred_fallthru
          _
      $region28: #{tpu_custom_call.1} parent=5 // pred_fallthru
        _
      %p577 = scmp.le.s32.totalorder 2, %s15
      // Predicated region
      $region41: #{tpu_custom_call.1} parent=5 // pred_check
        %p578 = pneg %p577
      $region42: #{tpu_custom_call.1} parent=5 // pred_check_branch
        %580 = sbr.rel (%p578) target = $region44
      $region43: #{tpu_custom_call.1} parent=5 // pred_region
        %s581 = ssub.s32 %s15, 2
        // Predicated region
        $region45: #{tpu_custom_call.1} parent=43 // pred_check
          %p582 = pneg %p110
        $region46: #{tpu_custom_call.1} parent=43 // pred_check_branch
          %584 = sbr.rel (%p582) target = $region48
        $region47: #{tpu_custom_call.1} parent=43 // pred_region
          %s585 = sand.u32 %s95, 1
          %s586 = scalar_lea.sflag [#allocation4], %s585
          %s587 = sand.u32 %s95, 1
          %s588 = smul.addr %s587, 64
          %s589 = scalar_lea.vmem [#allocation7], %s588
          %590 = dma.done %s586, 1024
        $region48: #{tpu_custom_call.1} parent=43 // pred_fallthru
          _
      $region44: #{tpu_custom_call.1} parent=5 // pred_fallthru
        _
    $region6: #{tpu_custom_call.1} parent=1 // loop_footer
      %s19 = sadd.s32 1, %s15
    $region7: #{tpu_custom_call.1} parent=1 // loop_footer_branch
      %14 = sbr.rel target = $region3
    $region8: #{tpu_custom_call.1} parent=1 // loop_exit
      _
    %591 = vsyncpa [#allocation3], 1
    %s592 = scalar_lea.sflag [#allocation3], 1
    %593 = vsyncpa %s592, 1
    %594 = vsyncpa [#allocation6], 1
    %595 = vsyncpa [#allocation4], 1
    %s596 = scalar_lea.sflag [#allocation4], 1
    %597 = vsyncpa %s596, 1

// kernel: tpu_custom_call.1
$region0: #{tpu_custom_call.1}
  #allocation0 [shape = 'u32[]', space=smem, size = 0x4, offset = 0x4, fixed_abs, tag = 'smem constant byte address 0x4 - core index']
  #allocation1 [shape = 'u32[144,128]{1,0:T(1,128)}', space=vmem, size = 0x12000, scoped, tag = 'internal scratch']
  %s0 = inlined_call_operand.hbm [shape: f32[2,4,16,16], index: 0, kind: input, shape index: {}]
  %s1 = inlined_call_operand.hbm [shape: f32[4,4,16,16], index: 1, kind: input, shape index: {}]
  %s2 = inlined_call_operand.hbm [shape: f32[2,4,16,16], index: 2, kind: output, shape index: {}]
  %s3 = sld [smem:[#allocation0]]
  $region49: #{tpu_custom_call.1} parent=0
    _
  %s5 = ssub.s32 1, %s3
  %s6 = scalar_select 0, %s5, %s3
  $region1: #{tpu_custom_call.1} parent=0
    #allocation2 [shape = 'u8[65536]{0}', space=vmem, size = 0x10000, scoped, tag = 'input window, operand 0']
    #allocation3 [shape = 's32[2]{0}', space=sflag, size = 0x8, scoped, tag = 'scoped memory for tpu_custom_call.1']
    #allocation4 [shape = 's32[2]{0}', space=sflag, size = 0x8, scoped, tag = 'scoped memory for tpu_custom_call.1']
    #allocation5 [shape = 'u8[131072]{0}', space=vmem, size = 0x20000, scoped, tag = 'input window, operand 1, single buffered']
    #allocation6 [shape = 's32[1]{0}', space=sflag, size = 0x4, scoped, tag = 'scoped memory for tpu_custom_call.1']
    #allocation7 [shape = 'u8[65536]{0}', space=vmem, size = 0x10000, scoped, tag = 'output window, operand 0']
    %7 = vsyncpa [#allocation3], 0
    %s8 = scalar_lea.sflag [#allocation3], 1
    %9 = vsyncpa %s8, 0
    %10 = vsyncpa [#allocation6], 0
    %11 = vsyncpa [#allocation4], 0
    %s12 = scalar_lea.sflag [#allocation4], 1
    %13 = vsyncpa %s12, 0
    loop: start=0, step=1, limit=4
    $region2: #{tpu_custom_call.1} parent=1 // loop_pre_header
      _
    $region3: #{tpu_custom_call.1} parent=1 // loop_header
      %s15 = sphi 0, %s19
      %p16 = scmp.ge.s32.totalorder %s15, 4
      %s22 = sphi 0, %s34
      %s23 = sphi 0, %s30
      %s24 = sphi 0, %s22
      %s25 = sphi 0, %s23
      %s26 = sphi 0, %s24
      %s27 = sphi 0, %s25
      %s37 = sphi 0, %s39
      %s40 = sphi 0, %s37
      %s41 = sphi 0, %s40
      %s57 = sphi 0, %s41
      %s63 = sphi 0, %s65
      %s66 = sphi 0, %s63
      %s67 = sphi 0, %s66
      %s83 = sphi 0, %s67
      %s91 = sphi 0, %s93
      %s94 = sphi 0, %s91
      %s95 = sphi 0, %s94
      %s111 = sphi 0, %s95
    $region4: #{tpu_custom_call.1} parent=1 // loop_header_branch
      %18 = sbr.rel (%p16) target = $region8
    $region5: #{tpu_custom_call.1} parent=1 // loop_body
      %s20 = ssub.s32 %s15, 1
      %s21 = ssub.s32 %s15, 2
      %s28 = sadd.s32 1, %s23
      %p29 = scmp.ge.s32.totalorder %s28, 2
      %s30 = scalar_select %p29, 0, %s28
      %s31 = sadd.s32 1, %s22
      %s32 = scalar_select %p29, %s31, %s22
      %p33 = scmp.ge.s32.totalorder %s32, 1
      %s34 = scalar_select %p33, 0, %s32
      %s35 = ssub.s32 %s23, %s30
      %p36 = scmp.eq.s32.totalorder %s35, 0
      %s38 = sadd.s32 %s37, 1
      %s39 = scalar_select %p36, %s37, %s38
      %p42 = pneg %p36
      %p43 = scmp.eq.s32.totalorder %s15, 1
      %p44 = por %p42, %p43
      %p45 = scmp.ne.s32.totalorder %s37, %s40
      %p46 = scmp.eq.s32.totalorder %s15, 0
      %p47 = por %p45, %p46
      %p48 = scmp.ne.s32.totalorder %s37, %s40
      %p49 = scmp.eq.s32.totalorder %s20, 1
      %p50 = por %p48, %p49
      %p51 = scmp.ne.s32.totalorder %s40, %s41
      %p52 = scmp.eq.s32.totalorder %s20, 0
      %p53 = por %p51, %p52
      %p54 = scmp.ne.s32.totalorder %s40, %s41
      %p55 = scmp.eq.s32.totalorder %s21, 1
      %p56 = por %p54, %p55
      %p58 = scmp.ne.s32.totalorder %s41, %s57
      %p59 = scmp.eq.s32.totalorder %s21, 0
      %p60 = por %p58, %p59
      %s61 = ssub.s32 %s22, %s34
      %p62 = scmp.eq.s32.totalorder %s61, 0
      %s64 = sadd.s32 %s63, 1
      %s65 = scalar_select %p62, %s63, %s64
      %p68 = pneg %p62
      %p69 = scmp.eq.s32.totalorder %s15, 1
      %p70 = por %p68, %p69
      %p71 = scmp.ne.s32.totalorder %s63, %s66
      %p72 = scmp.eq.s32.totalorder %s15, 0
      %p73 = por %p71, %p72
      %p74 = scmp.ne.s32.totalorder %s63, %s66
      %p75 = scmp.eq.s32.totalorder %s20, 1
      %p76 = por %p74, %p75
      %p77 = scmp.ne.s32.totalorder %s66, %s67
      %p78 = scmp.eq.s32.totalorder %s20, 0
      %p79 = por %p77, %p78
      %p80 = scmp.ne.s32.totalorder %s66, %s67
      %p81 = scmp.eq.s32.totalorder %s21, 1
      %p82 = por %p80, %p81
      %p84 = scmp.ne.s32.totalorder %s67, %s83
      %p85 = scmp.eq.s32.totalorder %s21, 0
      %p86 = por %p84, %p85
      %s87 = ssub.s32 %s23, %s30
      %s88 = ssub.s32 %s22, %s34
      %s89 = sor.u32 %s87, %s88
      %p90 = scmp.eq.s32.totalorder %s89, 0
      %s92 = sadd.s32 %s91, 1
      %s93 = scalar_select %p90, %s91, %s92
      %p96 = pneg %p90
      %p97 = scmp.eq.s32.totalorder %s15, 1
      %p98 = por %p96, %p97
      %p99 = scmp.ne.s32.totalorder %s91, %s94
      %p100 = scmp.eq.s32.totalorder %s15, 0
      %p101 = por %p99, %p100
      %p102 = scmp.ne.s32.totalorder %s91, %s94
      %p103 = scmp.eq.s32.totalorder %s20, 1
      %p104 = por %p102, %p103
      %p105 = scmp.ne.s32.totalorder %s94, %s95
      %p106 = scmp.eq.s32.totalorder %s20, 0
      %p107 = por %p105, %p106
      %p108 = scmp.ne.s32.totalorder %s94, %s95
      %p109 = scmp.eq.s32.totalorder %s21, 1
      %p110 = por %p108, %p109
      %p112 = scmp.ne.s32.totalorder %s95, %s111
      %p113 = scmp.eq.s32.totalorder %s21, 0
      %p114 = por %p112, %p113
      %p115 = scmp.le.s32.totalorder 1, %s15
      %p116 = scmp.lt.s32.totalorder %s15, 3
      %p117 = pnand %p115, %p116
      %p118 = pneg %p117
      // Predicated region
      $region9: #{tpu_custom_call.1} parent=5 // pred_check
        _
      $region10: #{tpu_custom_call.1} parent=5 // pred_check_branch
        %120 = sbr.rel (%p117) target = $region12
      $region11: #{tpu_custom_call.1} parent=5 // pred_region
        %s121 = ssub.s32 %s15, 1
        // Predicated region
        $region13: #{tpu_custom_call.1} parent=11 // pred_check
          %p122 = pneg %p79
        $region14: #{tpu_custom_call.1} parent=11 // pred_check_branch
          %124 = sbr.rel (%p122) target = $region16
        $region15: #{tpu_custom_call.1} parent=11 // pred_region
          %s125 = smul.u32 4, %s24
          %s127 = ssub.s32 4096, 4096
          %128 = vsyncadd [#allocation6], %s127
          %s129 = smul.addr %s125, 2
          %s130 = smul.addr %s129, 128
          %s131 = scalar_lea.hbm %s1, %s130
          %s132 = sshll.u32 [#allocation5], 4
          %s133 = int_to_ptr.vmem [resolvable:$true] %s132
          %138 = dma.hbm_to_vmem [thread:$0]  %s131, 4096, %s133, [#allocation6], 128, 128, 8
        $region16: #{tpu_custom_call.1} parent=11 // pred_fallthru
          _
      $region12: #{tpu_custom_call.1} parent=5 // pred_fallthru
        _
      %p139 = scmp.lt.s32.totalorder %s15, 2
      // Predicated region
      $region17: #{tpu_custom_call.1} parent=5 // pred_check
        %p140 = pneg %p139
      $region18: #{tpu_custom_call.1} parent=5 // pred_check_branch
        %142 = sbr.rel (%p140) target = $region20
      $region19: #{tpu_custom_call.1} parent=5 // pred_region
        // Predicated region
        $region21: #{tpu_custom_call.1} parent=19 // pred_check
          %p143 = pneg %p47
        $region22: #{tpu_custom_call.1} parent=19 // pred_check_branch
          %145 = sbr.rel (%p143) target = $region24
        $region23: #{tpu_custom_call.1} parent=19 // pred_region
          %s146 = sand.u32 %s37, 1
          %s147 = scalar_lea.sflag [#allocation3], %s146
          %s148 = sand.u32 %s37, 1
          %s149 = smul.addr %s148, 64
          %s150 = scalar_lea.vmem [#allocation2], %s149
          %s152 = ssub.s32 1024, 1024
          %153 = vsyncadd %s147, %s152
          %s154 = smul.addr %s23, 8
          %s155 = smul.addr %s154, 128
          %s156 = scalar_lea.hbm %s0, %s155
          %s157 = sshll.u32 %s150, 4
          %s158 = int_to_ptr.vmem [resolvable:$true] %s157
          %163 = dma.hbm_to_vmem [thread:$0]  %s156, 1024, %s158, %s147, 128, 128, 8
        $region24: #{tpu_custom_call.1} parent=19 // pred_fallthru
          _
      $region20: #{tpu_custom_call.1} parent=5 // pred_fallthru
        _
      %p164 = scmp.le.s32.totalorder 1, %s15
      %p165 = scmp.lt.s32.totalorder %s15, 3
      %p166 = pnand %p164, %p165
      %p167 = pneg %p166
      // Predicated region
      $region25: #{tpu_custom_call.1} parent=5 // pred_check
        _
      $region26: #{tpu_custom_call.1} parent=5 // pred_check_branch
        %169 = sbr.rel (%p166) target = $region28
      $region27: #{tpu_custom_call.1} parent=5 // pred_region
        %s170 = ssub.s32 %s15, 1
        %s171 = sand.u32 %s40, 1
        %s172 = scalar_lea.sflag [#allocation3], %s171
        %s173 = sand.u32 %s40, 1
        %s174 = smul.addr %s173, 64
        %s175 = scalar_lea.vmem [#allocation2], %s174
        // Predicated region
        $region29: #{tpu_custom_call.1} parent=27 // pred_check
          %p176 = pneg %p53
        $region30: #{tpu_custom_call.1} parent=27 // pred_check_branch
          %178 = sbr.rel (%p176) target = $region32
        $region31: #{tpu_custom_call.1} parent=27 // pred_region
          %179 = dma.done %s172, 1024
        $region32: #{tpu_custom_call.1} parent=27 // pred_fallthru
          _
        // Predicated region
        $region33: #{tpu_custom_call.1} parent=27 // pred_check
          %p180 = pneg %p79
        $region34: #{tpu_custom_call.1} parent=27 // pred_check_branch
          %182 = sbr.rel (%p180) target = $region36
        $region35: #{tpu_custom_call.1} parent=27 // pred_region
          %183 = dma.done [#allocation6], 4096
        $region36: #{tpu_custom_call.1} parent=27 // pred_fallthru
          _
        %s184 = sand.u32 %s40, 1
        %s185 = scalar_lea.sflag [#allocation3], %s184
        %s186 = sand.u32 %s40, 1
        %s187 = smul.addr %s186, 64
        %s188 = scalar_lea.vmem [#allocation2], %s187
        %p189 = pneg %p53
        %p190 = pneg %p50
        %p191 = pneg %p79
        %p192 = pneg %p76
        %p193 = pneg %p107
        %p194 = pneg %p104
        %s195 = sand.u32 %s94, 1
        %s196 = scalar_lea.sflag [#allocation4], %s195
        %s197 = sand.u32 %s94, 1
        %s198 = smul.addr %s197, 64
        %s199 = scalar_lea.vmem [#allocation7], %s198
        %s200 = smul.u32 4, %s24
        %s201 = smul.u32 4, %s24
        %v202 = vld [vmem:[%s175] sm:$0xff]
        %v203 = vld [vmem:[%s175 + $0x8] sm:$0xff]
        %v204 = vld [vmem:[#allocation5] sm:$0xff]
        %v205 = vld [vmem:[#allocation5 + $0x8] sm:$0xff]
        %v206 = vld [vmem:[#allocation5 + $0x10] sm:$0xff]
        %v207 = vld [vmem:[#allocation5 + $0x18] sm:$0xff]
        %v208 = vld [vmem:[#allocation5 + $0x20] sm:$0xff]
        %v209 = vld [vmem:[#allocation5 + $0x28] sm:$0xff]
        %v210 = vld [vmem:[#allocation5 + $0x30] sm:$0xff]
        %v211 = vld [vmem:[#allocation5 + $0x38] sm:$0xff]
        %v212 = vmul.f32 %v202, %v204
        %v213 = vmul.f32 %v203, %v205
        %v214 = vmul.f32 %v202, %v206
        %v215 = vmul.f32 %v203, %v207
        %v216 = vmul.f32 %v202, %v208
        %v217 = vmul.f32 %v203, %v209
        %v218 = vmul.f32 %v202, %v210
        %v219 = vmul.f32 %v203, %v211
        %vm220 = vcmask 130048
        %v221 = vsel %vm220, %v212, 0.0
        %v222 = vsel %vm220, %v213, 0.0
        %v223 = vadd.f32 %v221, %v222
        %v224 = vrot.slane %v223, 4
        %v225 = vadd.f32 %v223, %v224
        %v226 = vrot.slane %v225, 2
        %v227 = vadd.f32 %v225, %v226
        %v228 = vrot.slane %v227, 1
        %v229 = vadd.f32 %v227, %v228
        %v230 = vsel %vm220, %v214, 0.0
        %v231 = vsel %vm220, %v215, 0.0
        %v232 = vadd.f32 %v230, %v231
        %v233 = vrot.slane %v232, 4
        %v234 = vadd.f32 %v232, %v233
        %v235 = vrot.slane %v234, 2
        %v236 = vadd.f32 %v234, %v235
        %v237 = vrot.slane %v236, 1
        %v238 = vadd.f32 %v236, %v237
        %v239 = vsel %vm220, %v216, 0.0
        %v240 = vsel %vm220, %v217, 0.0
        %v241 = vadd.f32 %v239, %v240
        %v242 = vrot.slane %v241, 4
        %v243 = vadd.f32 %v241, %v242
        %v244 = vrot.slane %v243, 2
        %v245 = vadd.f32 %v243, %v244
        %v246 = vrot.slane %v245, 1
        %v247 = vadd.f32 %v245, %v246
        %v248 = vsel %vm220, %v218, 0.0
        %v249 = vsel %vm220, %v219, 0.0
        %v250 = vadd.f32 %v248, %v249
        %v251 = vrot.slane %v250, 4
        %v252 = vadd.f32 %v250, %v251
        %v253 = vrot.slane %v252, 2
        %v254 = vadd.f32 %v252, %v253
        %v255 = vrot.slane %v254, 1
        %v256 = vadd.f32 %v254, %v255
        %v257 = vadd.f32 %v229, 0.0
        %v258 = vadd.f32 %v238, 0.0
        %v259 = vadd.f32 %v247, 0.0
        %v260 = vadd.f32 %v256, 0.0
        %261 = vadd.xlane.f32.xlu0 %v221
        %v262 = vpop.xlane.xlu0 %261
        %263 = vadd.xlane.f32.xlu0 %v222
        %v264 = vpop.xlane.xlu0 %263
        %265 = vadd.xlane.f32.xlu0 %v230
        %v266 = vpop.xlane.xlu0 %265
        %267 = vadd.xlane.f32.xlu0 %v231
        %v268 = vpop.xlane.xlu0 %267
        %269 = vadd.xlane.f32.xlu0 %v239
        %v270 = vpop.xlane.xlu0 %269
        %271 = vadd.xlane.f32.xlu0 %v240
        %v272 = vpop.xlane.xlu0 %271
        %273 = vadd.xlane.f32.xlu0 %v248
        %v274 = vpop.xlane.xlu0 %273
        %275 = vadd.xlane.f32.xlu0 %v249
        %v276 = vpop.xlane.xlu0 %275
        %v277 = vadd.f32 %v262, 0.0
        %v278 = vadd.f32 %v264, 0.0
        %v279 = vadd.f32 %v266, 0.0
        %v280 = vadd.f32 %v268, 0.0
        %v281 = vadd.f32 %v270, 0.0
        %v282 = vadd.f32 %v272, 0.0
        %v283 = vadd.f32 %v274, 0.0
        %v284 = vadd.f32 %v276, 0.0
        %s285 = scalar_lea.vmem %s175, 16 [#allocation2]
        %v286 = vld [vmem:[%s285] sm:$0xff]
        %v287 = vld [vmem:[%s285 + $0x8] sm:$0xff]
        %s288 = scalar_lea.vmem [#allocation5], 64
        %v289 = vld [vmem:[%s288] sm:$0xff]
        %v290 = vld [vmem:[%s288 + $0x8] sm:$0xff]
        %v291 = vld [vmem:[%s288 + $0x10] sm:$0xff]
        %v292 = vld [vmem:[%s288 + $0x18] sm:$0xff]
        %v293 = vld [vmem:[%s288 + $0x20] sm:$0xff]
        %v294 = vld [vmem:[%s288 + $0x28] sm:$0xff]
        %v295 = vld [vmem:[%s288 + $0x30] sm:$0xff]
        %v296 = vld [vmem:[%s288 + $0x38] sm:$0xff]
        %v297 = vmul.f32 %v286, %v289
        %v298 = vmul.f32 %v287, %v290
        %v299 = vmul.f32 %v286, %v291
        %v300 = vmul.f32 %v287, %v292
        %v301 = vmul.f32 %v286, %v293
        %v302 = vmul.f32 %v287, %v294
        %v303 = vmul.f32 %v286, %v295
        %v304 = vmul.f32 %v287, %v296
        %v305 = vsel %vm220, %v297, 0.0
        %v306 = vsel %vm220, %v298, 0.0
        %v307 = vadd.f32 %v305, %v306
        %v308 = vrot.slane %v307, 4
        %v309 = vadd.f32 %v307, %v308
        %v310 = vrot.slane %v309, 2
        %v311 = vadd.f32 %v309, %v310
        %v312 = vrot.slane %v311, 1
        %v313 = vadd.f32 %v311, %v312
        %v314 = vsel %vm220, %v299, 0.0
        %v315 = vsel %vm220, %v300, 0.0
        %v316 = vadd.f32 %v314, %v315
        %v317 = vrot.slane %v316, 4
        %v318 = vadd.f32 %v316, %v317
        %v319 = vrot.slane %v318, 2
        %v320 = vadd.f32 %v318, %v319
        %v321 = vrot.slane %v320, 1
        %v322 = vadd.f32 %v320, %v321
        %v323 = vsel %vm220, %v301, 0.0
        %v324 = vsel %vm220, %v302, 0.0
        %v325 = vadd.f32 %v323, %v324
        %v326 = vrot.slane %v325, 4
        %v327 = vadd.f32 %v325, %v326
        %v328 = vrot.slane %v327, 2
        %v329 = vadd.f32 %v327, %v328
        %v330 = vrot.slane %v329, 1
        %v331 = vadd.f32 %v329, %v330
        %v332 = vsel %vm220, %v303, 0.0
        %v333 = vsel %vm220, %v304, 0.0
        %v334 = vadd.f32 %v332, %v333
        %v335 = vrot.slane %v334, 4
        %v336 = vadd.f32 %v334, %v335
        %v337 = vrot.slane %v336, 2
        %v338 = vadd.f32 %v336, %v337
        %v339 = vrot.slane %v338, 1
        %v340 = vadd.f32 %v338, %v339
        %v341 = vadd.f32 %v257, %v313
        %v342 = vadd.f32 %v258, %v322
        %v343 = vadd.f32 %v259, %v331
        %v344 = vadd.f32 %v260, %v340
        %345 = vadd.xlane.f32.xlu0 %v305
        %v346 = vpop.xlane.xlu0 %345
        %347 = vadd.xlane.f32.xlu0 %v306
        %v348 = vpop.xlane.xlu0 %347
        %349 = vadd.xlane.f32.xlu0 %v314
        %v350 = vpop.xlane.xlu0 %349
        %351 = vadd.xlane.f32.xlu0 %v315
        %v352 = vpop.xlane.xlu0 %351
        %353 = vadd.xlane.f32.xlu0 %v323
        %v354 = vpop.xlane.xlu0 %353
        %355 = vadd.xlane.f32.xlu0 %v324
        %v356 = vpop.xlane.xlu0 %355
        %357 = vadd.xlane.f32.xlu0 %v332
        %v358 = vpop.xlane.xlu0 %357
        %359 = vadd.xlane.f32.xlu0 %v333
        %v360 = vpop.xlane.xlu0 %359
        %v361 = vadd.f32 %v277, %v346
        %v362 = vadd.f32 %v278, %v348
        %v363 = vadd.f32 %v279, %v350
        %v364 = vadd.f32 %v280, %v352
        %v365 = vadd.f32 %v281, %v354
        %v366 = vadd.f32 %v282, %v356
        %v367 = vadd.f32 %v283, %v358
        %v368 = vadd.f32 %v284, %v360
        %s369 = scalar_lea.vmem %s175, 32 [#allocation2]
        %v370 = vld [vmem:[%s369] sm:$0xff]
        %v371 = vld [vmem:[%s369 + $0x8] sm:$0xff]
        %s372 = scalar_lea.vmem [#allocation5], 128
        %v373 = vld [vmem:[%s372] sm:$0xff]
        %v374 = vld [vmem:[%s372 + $0x8] sm:$0xff]
        %v375 = vld [vmem:[%s372 + $0x10] sm:$0xff]
        %v376 = vld [vmem:[%s372 + $0x18] sm:$0xff]
        %v377 = vld [vmem:[%s372 + $0x20] sm:$0xff]
        %v378 = vld [vmem:[%s372 + $0x28] sm:$0xff]
        %v379 = vld [vmem:[%s372 + $0x30] sm:$0xff]
        %v380 = vld [vmem:[%s372 + $0x38] sm:$0xff]
        %v381 = vmul.f32 %v370, %v373
        %v382 = vmul.f32 %v371, %v374
        %v383 = vmul.f32 %v370, %v375
        %v384 = vmul.f32 %v371, %v376
        %v385 = vmul.f32 %v370, %v377
        %v386 = vmul.f32 %v371, %v378
        %v387 = vmul.f32 %v370, %v379
        %v388 = vmul.f32 %v371, %v380
        %v389 = vsel %vm220, %v381, 0.0
        %v390 = vsel %vm220, %v382, 0.0
        %v391 = vadd.f32 %v389, %v390
        %v392 = vrot.slane %v391, 4
        %v393 = vadd.f32 %v391, %v392
        %v394 = vrot.slane %v393, 2
        %v395 = vadd.f32 %v393, %v394
        %v396 = vrot.slane %v395, 1
        %v397 = vadd.f32 %v395, %v396
        %v398 = vsel %vm220, %v383, 0.0
        %v399 = vsel %vm220, %v384, 0.0
        %v400 = vadd.f32 %v398, %v399
        %v401 = vrot.slane %v400, 4
        %v402 = vadd.f32 %v400, %v401
        %v403 = vrot.slane %v402, 2
        %v404 = vadd.f32 %v402, %v403
        %v405 = vrot.slane %v404, 1
        %v406 = vadd.f32 %v404, %v405
        %v407 = vsel %vm220, %v385, 0.0
        %v408 = vsel %vm220, %v386, 0.0
        %v409 = vadd.f32 %v407, %v408
        %v410 = vrot.slane %v409, 4
        %v411 = vadd.f32 %v409, %v410
        %v412 = vrot.slane %v411, 2
        %v413 = vadd.f32 %v411, %v412
        %v414 = vrot.slane %v413, 1
        %v415 = vadd.f32 %v413, %v414
        %v416 = vsel %vm220, %v387, 0.0
        %v417 = vsel %vm220, %v388, 0.0
        %v418 = vadd.f32 %v416, %v417
        %v419 = vrot.slane %v418, 4
        %v420 = vadd.f32 %v418, %v419
        %v421 = vrot.slane %v420, 2
        %v422 = vadd.f32 %v420, %v421
        %v423 = vrot.slane %v422, 1
        %v424 = vadd.f32 %v422, %v423
        %v425 = vadd.f32 %v341, %v397
        %v426 = vadd.f32 %v342, %v406
        %v427 = vadd.f32 %v343, %v415
        %v428 = vadd.f32 %v344, %v424
        %429 = vadd.xlane.f32.xlu0 %v389
        %v430 = vpop.xlane.xlu0 %429
        %431 = vadd.xlane.f32.xlu0 %v390
        %v432 = vpop.xlane.xlu0 %431
        %433 = vadd.xlane.f32.xlu0 %v398
        %v434 = vpop.xlane.xlu0 %433
        %435 = vadd.xlane.f32.xlu0 %v399
        %v436 = vpop.xlane.xlu0 %435
        %437 = vadd.xlane.f32.xlu0 %v407
        %v438 = vpop.xlane.xlu0 %437
        %439 = vadd.xlane.f32.xlu0 %v408
        %v440 = vpop.xlane.xlu0 %439
        %441 = vadd.xlane.f32.xlu0 %v416
        %v442 = vpop.xlane.xlu0 %441
        %443 = vadd.xlane.f32.xlu0 %v417
        %v444 = vpop.xlane.xlu0 %443
        %v445 = vadd.f32 %v361, %v430
        %v446 = vadd.f32 %v362, %v432
        %v447 = vadd.f32 %v363, %v434
        %v448 = vadd.f32 %v364, %v436
        %v449 = vadd.f32 %v365, %v438
        %v450 = vadd.f32 %v366, %v440
        %v451 = vadd.f32 %v367, %v442
        %v452 = vadd.f32 %v368, %v444
        %s453 = scalar_lea.vmem %s175, 48 [#allocation2]
        %v454 = vld [vmem:[%s453] sm:$0xff]
        %v455 = vld [vmem:[%s453 + $0x8] sm:$0xff]
        %s456 = scalar_lea.vmem [#allocation5], 192
        %v457 = vld [vmem:[%s456] sm:$0xff]
        %v458 = vld [vmem:[%s456 + $0x8] sm:$0xff]
        %v459 = vld [vmem:[%s456 + $0x10] sm:$0xff]
        %v460 = vld [vmem:[%s456 + $0x18] sm:$0xff]
        %v461 = vld [vmem:[%s456 + $0x20] sm:$0xff]
        %v462 = vld [vmem:[%s456 + $0x28] sm:$0xff]
        %v463 = vld [vmem:[%s456 + $0x30] sm:$0xff]
        %v464 = vld [vmem:[%s456 + $0x38] sm:$0xff]
        %v465 = vmul.f32 %v454, %v457
        %v466 = vmul.f32 %v455, %v458
        %v467 = vmul.f32 %v454, %v459
        %v468 = vmul.f32 %v455, %v460
        %v469 = vmul.f32 %v454, %v461
        %v470 = vmul.f32 %v455, %v462
        %v471 = vmul.f32 %v454, %v463
        %v472 = vmul.f32 %v455, %v464
        %v473 = vsel %vm220, %v465, 0.0
        %v474 = vsel %vm220, %v466, 0.0
        %v475 = vadd.f32 %v473, %v474
        %v476 = vrot.slane %v475, 4
        %v477 = vadd.f32 %v475, %v476
        %v478 = vrot.slane %v477, 2
        %v479 = vadd.f32 %v477, %v478
        %v480 = vrot.slane %v479, 1
        %v481 = vadd.f32 %v479, %v480
        %v482 = vsel %vm220, %v467, 0.0
        %v483 = vsel %vm220, %v468, 0.0
        %v484 = vadd.f32 %v482, %v483
        %v485 = vrot.slane %v484, 4
        %v486 = vadd.f32 %v484, %v485
        %v487 = vrot.slane %v486, 2
        %v488 = vadd.f32 %v486, %v487
        %v489 = vrot.slane %v488, 1
        %v490 = vadd.f32 %v488, %v489
        %v491 = vsel %vm220, %v469, 0.0
        %v492 = vsel %vm220, %v470, 0.0
        %v493 = vadd.f32 %v491, %v492
        %v494 = vrot.slane %v493, 4
        %v495 = vadd.f32 %v493, %v494
        %v496 = vrot.slane %v495, 2
        %v497 = vadd.f32 %v495, %v496
        %v498 = vrot.slane %v497, 1
        %v499 = vadd.f32 %v497, %v498
        %v500 = vsel %vm220, %v471, 0.0
        %v501 = vsel %vm220, %v472, 0.0
        %v502 = vadd.f32 %v500, %v501
        %v503 = vrot.slane %v502, 4
        %v504 = vadd.f32 %v502, %v503
        %v505 = vrot.slane %v504, 2
        %v506 = vadd.f32 %v504, %v505
        %v507 = vrot.slane %v506, 1
        %v508 = vadd.f32 %v506, %v507
        %v509 = vadd.f32 %v425, %v481
        %v510 = vadd.f32 %v426, %v490
        %v511 = vadd.f32 %v427, %v499
        %v512 = vadd.f32 %v428, %v508
        %513 = vadd.xlane.f32.xlu0 %v473
        %v514 = vpop.xlane.xlu0 %513
        %515 = vadd.xlane.f32.xlu0 %v474
        %v516 = vpop.xlane.xlu0 %515
        %517 = vadd.xlane.f32.xlu0 %v482
        %v518 = vpop.xlane.xlu0 %517
        %519 = vadd.xlane.f32.xlu0 %v483
        %v520 = vpop.xlane.xlu0 %519
        %521 = vadd.xlane.f32.xlu0 %v491
        %v522 = vpop.xlane.xlu0 %521
        %523 = vadd.xlane.f32.xlu0 %v492
        %v524 = vpop.xlane.xlu0 %523
        %525 = vadd.xlane.f32.xlu0 %v500
        %v526 = vpop.xlane.xlu0 %525
        %527 = vadd.xlane.f32.xlu0 %v501
        %v528 = vpop.xlane.xlu0 %527
        %v529 = vadd.f32 %v445, %v514
        %v530 = vadd.f32 %v446, %v516
        %v531 = vadd.f32 %v447, %v518
        %v532 = vadd.f32 %v448, %v520
        %v533 = vadd.f32 %v449, %v522
        %v534 = vadd.f32 %v450, %v524
        %v535 = vadd.f32 %v451, %v526
        %v536 = vadd.f32 %v452, %v528
        %v537 = vadd.f32 %v509, %v529
        %v538 = vadd.f32 %v509, %v530
        %v539 = vadd.f32 %v510, %v531
        %v540 = vadd.f32 %v510, %v532
        %v541 = vadd.f32 %v511, %v533
        %v542 = vadd.f32 %v511, %v534
        %v543 = vadd.f32 %v512, %v535
        %v544 = vadd.f32 %v512, %v536
        %545 = vst.msk [vmem:[%s199] sm:$0xff] %vm220, %v537
        %546 = vst.msk [vmem:[%s199 + $0x8] sm:$0xff] %vm220, %v538
        %547 = vst.msk [vmem:[%s199 + $0x10] sm:$0xff] %vm220, %v539
        %548 = vst.msk [vmem:[%s199 + $0x18] sm:$0xff] %vm220, %v540
        %549 = vst.msk [vmem:[%s199 + $0x20] sm:$0xff] %vm220, %v541
        %550 = vst.msk [vmem:[%s199 + $0x28] sm:$0xff] %vm220, %v542
        %551 = vst.msk [vmem:[%s199 + $0x30] sm:$0xff] %vm220, %v543
        %552 = vst.msk [vmem:[%s199 + $0x38] sm:$0xff] %vm220, %v544
        %s553 = sand.u32 %s94, 1
        %s554 = scalar_lea.sflag [#allocation4], %s553
        %s555 = sand.u32 %s94, 1
        %s556 = smul.addr %s555, 64
        %s557 = scalar_lea.vmem [#allocation7], %s556
        // Predicated region
        $region37: #{tpu_custom_call.1} parent=27 // pred_check
          %p558 = pneg %p104
        $region38: #{tpu_custom_call.1} parent=27 // pred_check_branch
          %560 = sbr.rel (%p558) target = $region40
        $region39: #{tpu_custom_call.1} parent=27 // pred_region
          %s561 = smul.u32 4, %s24
          %s563 = ssub.s32 1024, 1024
          %564 = vsyncadd %s554, %s563
          %s565 = smul.addr %s561, 2
          %s566 = smul.addr %s25, 8
          %s567 = sadd.s32 %s565, %s566
          %s568 = smul.addr %s567, 128
          %s569 = scalar_lea.hbm %s2, %s568
          %s570 = sshll.u32 %s557, 4
          %s571 = int_to_ptr.vmem [resolvable:$true] %s570
          %576 = dma.vmem_to_hbm [thread:$0]  %s571, 1024, %s569, %s554, 128, 128, 8
        $region40: #{tpu_custom_call.1} parent=27 // pred_fallthru
          _
      $region28: #{tpu_custom_call.1} parent=5 // pred_fallthru
        _
      %p577 = scmp.le.s32.totalorder 2, %s15
      // Predicated region
      $region41: #{tpu_custom_call.1} parent=5 // pred_check
        %p578 = pneg %p577
      $region42: #{tpu_custom_call.1} parent=5 // pred_check_branch
        %580 = sbr.rel (%p578) target = $region44
      $region43: #{tpu_custom_call.1} parent=5 // pred_region
        %s581 = ssub.s32 %s15, 2
        // Predicated region
        $region45: #{tpu_custom_call.1} parent=43 // pred_check
          %p582 = pneg %p110
        $region46: #{tpu_custom_call.1} parent=43 // pred_check_branch
          %584 = sbr.rel (%p582) target = $region48
        $region47: #{tpu_custom_call.1} parent=43 // pred_region
          %s585 = sand.u32 %s95, 1
          %s586 = scalar_lea.sflag [#allocation4], %s585
          %s587 = sand.u32 %s95, 1
          %s588 = smul.addr %s587, 64
          %s589 = scalar_lea.vmem [#allocation7], %s588
          %590 = dma.done %s586, 1024
        $region48: #{tpu_custom_call.1} parent=43 // pred_fallthru
          _
      $region44: #{tpu_custom_call.1} parent=5 // pred_fallthru
        _
    $region6: #{tpu_custom_call.1} parent=1 // loop_footer
      %s19 = sadd.s32 1, %s15
    $region7: #{tpu_custom_call.1} parent=1 // loop_footer_branch
      %14 = sbr.rel target = $region3
    $region8: #{tpu_custom_call.1} parent=1 // loop_exit
      _
    %591 = vsyncpa [#allocation3], 1
    %s592 = scalar_lea.sflag [#allocation3], 1
    %593 = vsyncpa %s592, 1
    %594 = vsyncpa [#allocation6], 1
    %595 = vsyncpa [#allocation4], 1
    %s596 = scalar_lea.sflag [#allocation4], 1
    %597 = vsyncpa %s596, 1

</llo_original>
